<compile_context>
chip_gen: v7x
topology: tpu7x:2x2x1
jax: 0.10.0
libtpu: 0.0.40
codegen_flags: <defaults>
</compile_context>

<pallas_src>
import functools

import jax
import jax.numpy as jnp
from jax import lax
from jax.experimental import pallas as pl
from jax.experimental.pallas import tpu as pltpu


# ----------------------------------------------------------------------------
# Pallas kernel
# ----------------------------------------------------------------------------
def _bilstm_mlp_kernel(x_ref, win_ref, whh_ref, mlp_ref, o_ref, *, T, B, TI, H2):
    """Fused BiLSTM + MLP head.

    x_ref   : (B, T*I)        raw input, batch-major flatten (free view)
    win_ref : (T*I+1, T*8H)   rows 0:T*I = W_big (block-sparse hoisted input
                              weight), last row = per-step gate bias tiled T×.
    whh_ref : (2H, 8H)        block-diagonal recurrent weight,
                              gate order [i|f|o|g], each 2H = [fwd|bwd].
    mlp_ref : (3*2H+3, 2H)    rows: w1 | wa(BN folded) | wb@w2 (cols 0:5 real)
                              | b1 | ba | b_bw2.
    g-gate columns of win/whh/bias are pre-scaled by 2 (tanh via 2σ(2x)-1).
    """
    f32, bf16 = jnp.float32, jnp.bfloat16
    G = 4 * H2  # fused gate width per step: [i|f|o|g] × [fwd|bwd]

    # ---- hoisted input projection, all steps & both directions: one GEMM ----
    w_big = win_ref[0:TI, :].astype(bf16)                       # (T*I, T*G)
    b_big = win_ref[TI:TI + 1, :]                               # (1,   T*G)  f32
    gall = jnp.dot(x_ref[...].astype(bf16), w_big,
                   preferred_element_type=f32) + b_big          # (B,   T*G)

    whh = whh_ref[...].astype(bf16)                             # (2H, 8H)

    h = jnp.zeros((B, H2), f32)   # [h_fwd | h_bwd]
    c = jnp.zeros((B, H2), f32)
    s = jnp.zeros((B, H2), f32)   # running sum of per-step outputs

    # ---- fused fwd+bwd recurrence, fully unrolled (T small & static) --------
    for t in range(T):
        gates = gall[:, t * G:(t + 1) * G] + jnp.dot(
            h.astype(bf16), whh, preferred_element_type=f32)    # (B, 8H)
        act = jax.nn.sigmoid(gates)                             # one full-width EUP pass
        i_g = act[:, 0:H2]
        f_g = act[:, H2:2 * H2]
        o_g = act[:, 2 * H2:3 * H2]
        g_g = 2.0 * act[:, 3 * H2:4 * H2] - 1.0                 # == tanh(orig g preact)
        c = f_g * c + i_g * g_g
        h = o_g * jnp.tanh(c)
        s = s + h

    hn = h                              # (B, 2H) == hn.permute(1,0,2).flatten(1)
    outputs_mean = s * (1.0 / T)        # (B, 2H)

    # ---- MLP head (weights packed in one 64-lane slab) ----------------------
    w1 = mlp_ref[0:H2, :]
    wa = mlp_ref[H2:2 * H2, :]                   # Linear + BN(eval) folded
    wbw2 = mlp_ref[2 * H2:3 * H2, :]             # wb @ w2 folded, cols 0:5 real
    bias3 = mlp_ref[3 * H2:3 * H2 + 3, :]        # rows: b1, ba, b_bw2
    b1, ba, bbw2 = bias3[0:1, :], bias3[1:2, :], bias3[2:3, :]

    om = jnp.dot(outputs_mean, w1, preferred_element_type=f32) + b1
    xb = hn * om
    y = jnp.maximum(jnp.dot(xb, wa, preferred_element_type=f32) + ba, 0.0)  # ReLU; Dropout(eval)=id
    out = jnp.dot(y, wbw2, preferred_element_type=f32) + bbw2               # (B, 2H), cols 0:5 real
    o_ref[...] = out[:, 0:5]


# ----------------------------------------------------------------------------
# Wrapper
# ----------------------------------------------------------------------------
@jax.jit
def run_model(x_bti, kp):
    """x_bti: (B, T, input_size) batch_first, like the PyTorch module."""
    B, T, I = x_bti.shape
    H2 = kp["whh"].shape[0]                     # 2 * hidden_size
    x2d = x_bti.reshape(B, T * I).astype(jnp.float32)   # free contiguous view

    kernel = functools.partial(_bilstm_mlp_kernel, T=T, B=B, TI=T * I, H2=H2)
    vmem = pl.BlockSpec(memory_space=pltpu.MemorySpace.VMEM)
    return pl.pallas_call(
        kernel,
        out_shape=jax.ShapeDtypeStruct((B, 5), jnp.float32),
        in_specs=[vmem] * 4,
        out_specs=vmem,
    )(x2d, kp["slab_in"], kp["whh"], kp["slab_mlp"])


# ----------------------------------------------------------------------------
# Parameter construction (PyTorch layout) + conversion to kernel layout
# ----------------------------------------------------------------------------
def init_params(key, input_size, hidden):
    """Deterministic synthetic parameters in PyTorch layout (incl. BN stats)."""
    H = hidden
    k_lstm = 1.0 / (H ** 0.5)
    k_lin = 1.0 / ((2 * H) ** 0.5)
    ks = list(jax.random.split(key, 20))

    def u(kk, shape, scale):
        return jax.random.uniform(kk, shape, jnp.float32, -scale, scale)

    return {
        # LSTM (PyTorch): weight_ih (4H, I), weight_hh (4H, H), gate order [i,f,g,o]
        "w_ih_f": u(ks[0], (4 * H, input_size), k_lstm),
        "w_hh_f": u(ks[1], (4 * H, H), k_lstm),
        "b_f": u(ks[2], (4 * H,), k_lstm) + u(ks[3], (4 * H,), k_lstm),   # b_ih + b_hh
        "w_ih_b": u(ks[4], (4 * H, input_size), k_lstm),
        "w_hh_b": u(ks[5], (4 * H, H), k_lstm),
        "b_b": u(ks[6], (4 * H,), k_lstm) + u(ks[7], (4 * H,), k_lstm),
        # linear1
        "w1": u(ks[8], (2 * H, 2 * H), k_lin), "b1": u(ks[9], (2 * H,), k_lin),
        # shared sq_block: Linear -> BN(eval) -> ReLU -> Dropout -> Linear
        "wa": u(ks[10], (2 * H, 2 * H), k_lin), "ba": u(ks[11], (2 * H,), k_lin),
        "gamma": jnp.ones((2 * H,), jnp.float32),
        "beta": jnp.zeros((2 * H,), jnp.float32),
        "running_mean": u(ks[16], (2 * H,), 0.1),
        "running_var": 1.0 + u(ks[17], (2 * H,), 0.5),
        "wb": u(ks[12], (2 * H, 2 * H), k_lin), "bb": u(ks[13], (2 * H,), k_lin),
        # linear2
        "w2": u(ks[14], (5, 2 * H), k_lin), "b2": u(ks[15], (5,), k_lin),
    }


def prepare_kernel_params(p, input_size, hidden, seq_len):
    """PyTorch layout -> kernel layout: gate reorder, fused fwd/bwd stacking,
    hoisted W_big, g-gate 2x pre-scale, BN folding, wb@w2 folding, slab packing."""
    H, I, T = hidden, input_size, seq_len
    H2, G = 2 * H, 8 * H

    def reorder(w):  # rows [i, f, g, o] -> [i, f, o, g]
        return jnp.concatenate([w[0:H], w[H:2 * H], w[3 * H:4 * H], w[2 * H:3 * H]], axis=0)

    wi_f, wi_b = reorder(p["w_ih_f"]), reorder(p["w_ih_b"])       # (4H, I)
    wh_f, wh_b = reorder(p["w_hh_f"]), reorder(p["w_hh_b"])       # (4H, H)
    b_f = reorder(p["b_f"][:, None])[:, 0]                        # (4H,)
    b_b = reorder(p["b_b"][:, None])[:, 0]

    # Per-step fused gate layout: cols [i|f|o|g], each 2H = [fwd | bwd].
    win_f = jnp.zeros((I, G), jnp.float32)   # fwd input weight (bwd cols zero)
    win_b = jnp.zeros((I, G), jnp.float32)   # bwd input weight (fwd cols zero)
    whh = jnp.zeros((H2, G), jnp.float32)    # block-diagonal recurrent weight
    b_fb = jnp.zeros((G,), jnp.float32)
    for k in range(4):                       # gate order [i, f, o, g]
        c0 = k * H2
        win_f = win_f.at[:, c0:c0 + H].set(wi_f[k * H:(k + 1) * H].T)
        win_b = win_b.at[:, c0 + H:c0 + H2].set(wi_b[k * H:(k + 1) * H].T)
        whh = whh.at[:H, c0:c0 + H].set(wh_f[k * H:(k + 1) * H].T)
        whh = whh.at[H:, c0 + H:c0 + H2].set(wh_b[k * H:(k + 1) * H].T)
        b_fb = b_fb.at[c0:c0 + H].set(b_f[k * H:(k + 1) * H])
        b_fb = b_fb.at[c0 + H:c0 + H2].set(b_b[k * H:(k + 1) * H])

    # Pre-scale g-gate columns by 2 -> one full-width sigmoid in the kernel
    # (tanh(z) recovered as 2*sigmoid(2z) - 1).
    gcols = slice(3 * H2, 4 * H2)
    win_f = win_f.at[:, gcols].multiply(2.0)
    win_b = win_b.at[:, gcols].multiply(2.0)
    whh = whh.at[:, gcols].multiply(2.0)
    b_fb = b_fb.at[gcols].multiply(2.0)

    # Hoisted block-sparse input weight: column block t consumes x[t] (fwd cols)
    # and x[T-1-t] (bwd cols).  Row index = tt*I + i matches x.reshape(B, T*I).
    w_big = jnp.zeros((T * I, T * G), jnp.float32)
    for t in range(T):
        w_big = w_big.at[t * I:(t + 1) * I, t * G:(t + 1) * G].add(win_f)
        w_big = w_big.at[(T - 1 - t) * I:(T - t) * I, t * G:(t + 1) * G].add(win_b)
    b_big = jnp.tile(b_fb, T)[None, :]                            # (1, T*G)
    slab_in = jnp.concatenate([w_big, b_big], axis=0)             # (T*I+1, T*G)

    # BatchNorm1d eval (running stats) folded into the first sq_block Linear.
    scale = p["gamma"] / jnp.sqrt(p["running_var"] + 1e-5)
    shift = p["beta"] - p["running_mean"] * scale
    wa_k = p["wa"].T * scale[None, :]
    ba_k = p["ba"] * scale + shift

    # Fold wb and w2 (no nonlinearity between them).
    wbw2 = p["wb"].T @ p["w2"].T                                  # (2H, 5)
    b_bw2 = p["bb"] @ p["w2"].T + p["b2"]                         # (5,)
    wbw2_pad = jnp.zeros((H2, H2), jnp.float32).at[:, :5].set(wbw2)
    bbw2_pad = jnp.zeros((H2,), jnp.float32).at[:5].set(b_bw2)

    slab_mlp = jnp.concatenate([
        p["w1"].T,                # rows 0      : H2
        wa_k,                     # rows H2     : 2*H2
        wbw2_pad,                 # rows 2*H2   : 3*H2   (cols 0:5 real)
        p["b1"][None, :],         # row  3*H2
        ba_k[None, :],            # row  3*H2+1
        bbw2_pad[None, :],        # row  3*H2+2
    ], axis=0)                                                    # (3*H2+3, H2)

    return {"slab_in": slab_in, "whh": whh, "slab_mlp": slab_mlp}


# ----------------------------------------------------------------------------
# Pure-JAX reference (PyTorch eval-mode semantics) for correctness checking
# ----------------------------------------------------------------------------
def ref_forward(x_bti, p, hidden):
    H = hidden
    B, T, _ = x_bti.shape

    def cell(carry, xt, wih, whh, b):
        h, c = carry
        gates = xt @ wih.T + h @ whh.T + b
        i = jax.nn.sigmoid(gates[:, :H])
        f = jax.nn.sigmoid(gates[:, H:2 * H])
        g = jnp.tanh(gates[:, 2 * H:3 * H])
        o = jax.nn.sigmoid(gates[:, 3 * H:])
        c = f * c + i * g
        h = o * jnp.tanh(c)
        return (h, c), h

    x_tbi = jnp.transpose(x_bti, (1, 0, 2))
    z = jnp.zeros((B, H), jnp.float32)
    (h_f, _), hs_f = lax.scan(
        lambda cr, xt: cell(cr, xt, p["w_ih_f"], p["w_hh_f"], p["b_f"]), (z, z), x_tbi)
    (h_b, _), hs_b = lax.scan(
        lambda cr, xt: cell(cr, xt, p["w_ih_b"], p["w_hh_b"], p["b_b"]), (z, z), x_tbi[::-1])

    outputs_mean = jnp.concatenate([hs_f.mean(0), hs_b.mean(0)], axis=-1)
    hn = jnp.concatenate([h_f, h_b], axis=-1)
    om = outputs_mean @ p["w1"].T + p["b1"]

    scale = p["gamma"] / jnp.sqrt(p["running_var"] + 1e-5)
    shift = p["beta"] - p["running_mean"] * scale
    x = None
    for _ in range(5):
        x = hn * om
        y = x @ p["wa"].T + p["ba"]
        y = y * scale + shift
        y = jnp.maximum(y, 0.0)            # Dropout(0.5) is identity in eval mode
        x = y @ p["wb"].T + p["bb"]
    return x @ p["w2"].T + p["b2"]


if __name__ == "__main__":
    B, T, INPUT_SIZE, HIDDEN = 2, 8, 4, 32

    key = jax.random.PRNGKey(0)
    kx, kparam = jax.random.split(key)
    x = jax.random.normal(kx, (B, T, INPUT_SIZE), jnp.float32)

    params = init_params(kparam, INPUT_SIZE, HIDDEN)
    kparams = prepare_kernel_params(params, INPUT_SIZE, HIDDEN, T)

    out = jax.block_until_ready(run_model(x, kparams))
    assert out.shape == (B, 5), out.shape

    ref = jax.block_until_ready(ref_forward(x, params, HIDDEN))
    max_err = float(jnp.max(jnp.abs(out - ref)))
    if not (max_err < 1e-2):
        raise AssertionError(f"Pallas kernel mismatch vs reference: max_err={max_err}")

    print("KERNEL_OK")
</pallas_src>

<mosaic_0001>
module attributes {stable_mosaic.version = 11 : i64} {
  func.func @_bilstm_mlp_kernel(%arg0: memref<2x32xf32, #tpu.memory_space<vmem>>, %arg1: memref<33x2048xf32, #tpu.memory_space<vmem>>, %arg2: memref<64x256xf32, #tpu.memory_space<vmem>>, %arg3: memref<195x64xf32, #tpu.memory_space<vmem>>, %arg4: memref<2x5xf32, #tpu.memory_space<vmem>>) attributes {dimension_semantics = [], scalar_prefetch = 0 : i64, scratch_operands = 0 : i64, tpu.core_type = #tpu.core_type<tc>} {
    %c0 = arith.constant 0 : index
    %c0_0 = arith.constant 0 : index
    %0 = vector.load %arg1[%c0, %c0_0] : memref<33x2048xf32, #tpu.memory_space<vmem>>, vector<32x2048xf32>
    %1 = arith.truncf %0 : vector<32x2048xf32> to vector<32x2048xbf16>
    %c32 = arith.constant 32 : index
    %c0_1 = arith.constant 0 : index
    %2 = vector.load %arg1[%c32, %c0_1] : memref<33x2048xf32, #tpu.memory_space<vmem>>, vector<1x2048xf32>
    %c0_2 = arith.constant 0 : index
    %c0_3 = arith.constant 0 : index
    %3 = vector.load %arg0[%c0_2, %c0_3] : memref<2x32xf32, #tpu.memory_space<vmem>>, vector<2x32xf32>
    %4 = arith.truncf %3 : vector<2x32xf32> to vector<2x32xbf16>
    %cst = arith.constant dense<0.000000e+00> : vector<2x2048xf32>
    %5 = tpu.matmul %4, %1, %cst {dimension_numbers = #tpu.dot_dimension_numbers<[1], [0], [0], [1], [0, 0, 1, 1], [], []>} : vector<2x32xbf16>, vector<32x2048xbf16>, vector<2x2048xf32> -> vector<2x2048xf32>
    %6 = vector.broadcast %2 : vector<1x2048xf32> to vector<2x2048xf32>
    %7 = arith.addf %5, %6 : vector<2x2048xf32>
    %c0_4 = arith.constant 0 : index
    %c0_5 = arith.constant 0 : index
    %8 = vector.load %arg2[%c0_4, %c0_5] : memref<64x256xf32, #tpu.memory_space<vmem>>, vector<64x256xf32>
    %9 = arith.truncf %8 : vector<64x256xf32> to vector<64x256xbf16>
    %cst_6 = arith.constant 0.000000e+00 : f32
    %10 = vector.broadcast %cst_6 : f32 to vector<2x64xf32>
    %cst_7 = arith.constant 0.000000e+00 : f32
    %11 = vector.broadcast %cst_7 : f32 to vector<2x64xf32>
    %cst_8 = arith.constant 0.000000e+00 : f32
    %12 = vector.broadcast %cst_8 : f32 to vector<2x64xf32>
    %13 = vector.extract_strided_slice %7 {offsets = [0, 0], sizes = [2, 256], strides = [1, 1]} : vector<2x2048xf32> to vector<2x256xf32>
    %14 = arith.truncf %10 : vector<2x64xf32> to vector<2x64xbf16>
    %cst_9 = arith.constant dense<0.000000e+00> : vector<2x256xf32>
    %15 = tpu.matmul %14, %9, %cst_9 {dimension_numbers = #tpu.dot_dimension_numbers<[1], [0], [0], [1], [0, 0, 1, 1], [], []>} : vector<2x64xbf16>, vector<64x256xbf16>, vector<2x256xf32> -> vector<2x256xf32>
    %16 = arith.addf %13, %15 : vector<2x256xf32>
    %17 = arith.negf %16 : vector<2x256xf32>
    %18 = math.exp %17 : vector<2x256xf32>
    %cst_10 = arith.constant 1.000000e+00 : f32
    %19 = vector.broadcast %cst_10 : f32 to vector<2x256xf32>
    %20 = arith.addf %19, %18 : vector<2x256xf32>
    %21 = arith.divf %19, %20 : vector<2x256xf32>
    %22 = vector.extract_strided_slice %21 {offsets = [0, 0], sizes = [2, 64], strides = [1, 1]} : vector<2x256xf32> to vector<2x64xf32>
    %23 = vector.extract_strided_slice %21 {offsets = [0, 64], sizes = [2, 64], strides = [1, 1]} : vector<2x256xf32> to vector<2x64xf32>
    %24 = vector.extract_strided_slice %21 {offsets = [0, 128], sizes = [2, 64], strides = [1, 1]} : vector<2x256xf32> to vector<2x64xf32>
    %25 = vector.extract_strided_slice %21 {offsets = [0, 192], sizes = [2, 64], strides = [1, 1]} : vector<2x256xf32> to vector<2x64xf32>
    %cst_11 = arith.constant 2.000000e+00 : f32
    %26 = vector.broadcast %cst_11 : f32 to vector<2x64xf32>
    %27 = arith.mulf %26, %25 : vector<2x64xf32>
    %cst_12 = arith.constant 1.000000e+00 : f32
    %28 = vector.broadcast %cst_12 : f32 to vector<2x64xf32>
    %29 = arith.subf %27, %28 : vector<2x64xf32>
    %30 = arith.mulf %23, %11 : vector<2x64xf32>
    %31 = arith.mulf %22, %29 : vector<2x64xf32>
    %32 = arith.addf %30, %31 : vector<2x64xf32>
    %33 = math.tanh %32 : vector<2x64xf32>
    %34 = arith.mulf %24, %33 : vector<2x64xf32>
    %35 = arith.addf %12, %34 : vector<2x64xf32>
    %36 = vector.extract_strided_slice %7 {offsets = [0, 256], sizes = [2, 256], strides = [1, 1]} : vector<2x2048xf32> to vector<2x256xf32>
    %37 = arith.truncf %34 : vector<2x64xf32> to vector<2x64xbf16>
    %cst_13 = arith.constant dense<0.000000e+00> : vector<2x256xf32>
    %38 = tpu.matmul %37, %9, %cst_13 {dimension_numbers = #tpu.dot_dimension_numbers<[1], [0], [0], [1], [0, 0, 1, 1], [], []>} : vector<2x64xbf16>, vector<64x256xbf16>, vector<2x256xf32> -> vector<2x256xf32>
    %39 = arith.addf %36, %38 : vector<2x256xf32>
    %40 = arith.negf %39 : vector<2x256xf32>
    %41 = math.exp %40 : vector<2x256xf32>
    %cst_14 = arith.constant 1.000000e+00 : f32
    %42 = vector.broadcast %cst_14 : f32 to vector<2x256xf32>
    %43 = arith.addf %42, %41 : vector<2x256xf32>
    %44 = arith.divf %42, %43 : vector<2x256xf32>
    %45 = vector.extract_strided_slice %44 {offsets = [0, 0], sizes = [2, 64], strides = [1, 1]} : vector<2x256xf32> to vector<2x64xf32>
    %46 = vector.extract_strided_slice %44 {offsets = [0, 64], sizes = [2, 64], strides = [1, 1]} : vector<2x256xf32> to vector<2x64xf32>
    %47 = vector.extract_strided_slice %44 {offsets = [0, 128], sizes = [2, 64], strides = [1, 1]} : vector<2x256xf32> to vector<2x64xf32>
    %48 = vector.extract_strided_slice %44 {offsets = [0, 192], sizes = [2, 64], strides = [1, 1]} : vector<2x256xf32> to vector<2x64xf32>
    %cst_15 = arith.constant 2.000000e+00 : f32
    %49 = vector.broadcast %cst_15 : f32 to vector<2x64xf32>
    %50 = arith.mulf %49, %48 : vector<2x64xf32>
    %cst_16 = arith.constant 1.000000e+00 : f32
    %51 = vector.broadcast %cst_16 : f32 to vector<2x64xf32>
    %52 = arith.subf %50, %51 : vector<2x64xf32>
    %53 = arith.mulf %46, %32 : vector<2x64xf32>
    %54 = arith.mulf %45, %52 : vector<2x64xf32>
    %55 = arith.addf %53, %54 : vector<2x64xf32>
    %56 = math.tanh %55 : vector<2x64xf32>
    %57 = arith.mulf %47, %56 : vector<2x64xf32>
    %58 = arith.addf %35, %57 : vector<2x64xf32>
    %59 = vector.extract_strided_slice %7 {offsets = [0, 512], sizes = [2, 256], strides = [1, 1]} : vector<2x2048xf32> to vector<2x256xf32>
    %60 = arith.truncf %57 : vector<2x64xf32> to vector<2x64xbf16>
    %cst_17 = arith.constant dense<0.000000e+00> : vector<2x256xf32>
    %61 = tpu.matmul %60, %9, %cst_17 {dimension_numbers = #tpu.dot_dimension_numbers<[1], [0], [0], [1], [0, 0, 1, 1], [], []>} : vector<2x64xbf16>, vector<64x256xbf16>, vector<2x256xf32> -> vector<2x256xf32>
    %62 = arith.addf %59, %61 : vector<2x256xf32>
    %63 = arith.negf %62 : vector<2x256xf32>
    %64 = math.exp %63 : vector<2x256xf32>
    %cst_18 = arith.constant 1.000000e+00 : f32
    %65 = vector.broadcast %cst_18 : f32 to vector<2x256xf32>
    %66 = arith.addf %65, %64 : vector<2x256xf32>
    %67 = arith.divf %65, %66 : vector<2x256xf32>
    %68 = vector.extract_strided_slice %67 {offsets = [0, 0], sizes = [2, 64], strides = [1, 1]} : vector<2x256xf32> to vector<2x64xf32>
    %69 = vector.extract_strided_slice %67 {offsets = [0, 64], sizes = [2, 64], strides = [1, 1]} : vector<2x256xf32> to vector<2x64xf32>
    %70 = vector.extract_strided_slice %67 {offsets = [0, 128], sizes = [2, 64], strides = [1, 1]} : vector<2x256xf32> to vector<2x64xf32>
    %71 = vector.extract_strided_slice %67 {offsets = [0, 192], sizes = [2, 64], strides = [1, 1]} : vector<2x256xf32> to vector<2x64xf32>
    %cst_19 = arith.constant 2.000000e+00 : f32
    %72 = vector.broadcast %cst_19 : f32 to vector<2x64xf32>
    %73 = arith.mulf %72, %71 : vector<2x64xf32>
    %cst_20 = arith.constant 1.000000e+00 : f32
    %74 = vector.broadcast %cst_20 : f32 to vector<2x64xf32>
    %75 = arith.subf %73, %74 : vector<2x64xf32>
    %76 = arith.mulf %69, %55 : vector<2x64xf32>
    %77 = arith.mulf %68, %75 : vector<2x64xf32>
    %78 = arith.addf %76, %77 : vector<2x64xf32>
    %79 = math.tanh %78 : vector<2x64xf32>
    %80 = arith.mulf %70, %79 : vector<2x64xf32>
    %81 = arith.addf %58, %80 : vector<2x64xf32>
    %82 = vector.extract_strided_slice %7 {offsets = [0, 768], sizes = [2, 256], strides = [1, 1]} : vector<2x2048xf32> to vector<2x256xf32>
    %83 = arith.truncf %80 : vector<2x64xf32> to vector<2x64xbf16>
    %cst_21 = arith.constant dense<0.000000e+00> : vector<2x256xf32>
    %84 = tpu.matmul %83, %9, %cst_21 {dimension_numbers = #tpu.dot_dimension_numbers<[1], [0], [0], [1], [0, 0, 1, 1], [], []>} : vector<2x64xbf16>, vector<64x256xbf16>, vector<2x256xf32> -> vector<2x256xf32>
    %85 = arith.addf %82, %84 : vector<2x256xf32>
    %86 = arith.negf %85 : vector<2x256xf32>
    %87 = math.exp %86 : vector<2x256xf32>
    %cst_22 = arith.constant 1.000000e+00 : f32
    %88 = vector.broadcast %cst_22 : f32 to vector<2x256xf32>
    %89 = arith.addf %88, %87 : vector<2x256xf32>
    %90 = arith.divf %88, %89 : vector<2x256xf32>
    %91 = vector.extract_strided_slice %90 {offsets = [0, 0], sizes = [2, 64], strides = [1, 1]} : vector<2x256xf32> to vector<2x64xf32>
    %92 = vector.extract_strided_slice %90 {offsets = [0, 64], sizes = [2, 64], strides = [1, 1]} : vector<2x256xf32> to vector<2x64xf32>
    %93 = vector.extract_strided_slice %90 {offsets = [0, 128], sizes = [2, 64], strides = [1, 1]} : vector<2x256xf32> to vector<2x64xf32>
    %94 = vector.extract_strided_slice %90 {offsets = [0, 192], sizes = [2, 64], strides = [1, 1]} : vector<2x256xf32> to vector<2x64xf32>
    %cst_23 = arith.constant 2.000000e+00 : f32
    %95 = vector.broadcast %cst_23 : f32 to vector<2x64xf32>
    %96 = arith.mulf %95, %94 : vector<2x64xf32>
    %cst_24 = arith.constant 1.000000e+00 : f32
    %97 = vector.broadcast %cst_24 : f32 to vector<2x64xf32>
    %98 = arith.subf %96, %97 : vector<2x64xf32>
    %99 = arith.mulf %92, %78 : vector<2x64xf32>
    %100 = arith.mulf %91, %98 : vector<2x64xf32>
    %101 = arith.addf %99, %100 : vector<2x64xf32>
    %102 = math.tanh %101 : vector<2x64xf32>
    %103 = arith.mulf %93, %102 : vector<2x64xf32>
    %104 = arith.addf %81, %103 : vector<2x64xf32>
    %105 = vector.extract_strided_slice %7 {offsets = [0, 1024], sizes = [2, 256], strides = [1, 1]} : vector<2x2048xf32> to vector<2x256xf32>
    %106 = arith.truncf %103 : vector<2x64xf32> to vector<2x64xbf16>
    %cst_25 = arith.constant dense<0.000000e+00> : vector<2x256xf32>
    %107 = tpu.matmul %106, %9, %cst_25 {dimension_numbers = #tpu.dot_dimension_numbers<[1], [0], [0], [1], [0, 0, 1, 1], [], []>} : vector<2x64xbf16>, vector<64x256xbf16>, vector<2x256xf32> -> vector<2x256xf32>
    %108 = arith.addf %105, %107 : vector<2x256xf32>
    %109 = arith.negf %108 : vector<2x256xf32>
    %110 = math.exp %109 : vector<2x256xf32>
    %cst_26 = arith.constant 1.000000e+00 : f32
    %111 = vector.broadcast %cst_26 : f32 to vector<2x256xf32>
    %112 = arith.addf %111, %110 : vector<2x256xf32>
    %113 = arith.divf %111, %112 : vector<2x256xf32>
    %114 = vector.extract_strided_slice %113 {offsets = [0, 0], sizes = [2, 64], strides = [1, 1]} : vector<2x256xf32> to vector<2x64xf32>
    %115 = vector.extract_strided_slice %113 {offsets = [0, 64], sizes = [2, 64], strides = [1, 1]} : vector<2x256xf32> to vector<2x64xf32>
    %116 = vector.extract_strided_slice %113 {offsets = [0, 128], sizes = [2, 64], strides = [1, 1]} : vector<2x256xf32> to vector<2x64xf32>
    %117 = vector.extract_strided_slice %113 {offsets = [0, 192], sizes = [2, 64], strides = [1, 1]} : vector<2x256xf32> to vector<2x64xf32>
    %cst_27 = arith.constant 2.000000e+00 : f32
    %118 = vector.broadcast %cst_27 : f32 to vector<2x64xf32>
    %119 = arith.mulf %118, %117 : vector<2x64xf32>
    %cst_28 = arith.constant 1.000000e+00 : f32
    %120 = vector.broadcast %cst_28 : f32 to vector<2x64xf32>
    %121 = arith.subf %119, %120 : vector<2x64xf32>
    %122 = arith.mulf %115, %101 : vector<2x64xf32>
    %123 = arith.mulf %114, %121 : vector<2x64xf32>
    %124 = arith.addf %122, %123 : vector<2x64xf32>
    %125 = math.tanh %124 : vector<2x64xf32>
    %126 = arith.mulf %116, %125 : vector<2x64xf32>
    %127 = arith.addf %104, %126 : vector<2x64xf32>
    %128 = vector.extract_strided_slice %7 {offsets = [0, 1280], sizes = [2, 256], strides = [1, 1]} : vector<2x2048xf32> to vector<2x256xf32>
    %129 = arith.truncf %126 : vector<2x64xf32> to vector<2x64xbf16>
    %cst_29 = arith.constant dense<0.000000e+00> : vector<2x256xf32>
    %130 = tpu.matmul %129, %9, %cst_29 {dimension_numbers = #tpu.dot_dimension_numbers<[1], [0], [0], [1], [0, 0, 1, 1], [], []>} : vector<2x64xbf16>, vector<64x256xbf16>, vector<2x256xf32> -> vector<2x256xf32>
    %131 = arith.addf %128, %130 : vector<2x256xf32>
    %132 = arith.negf %131 : vector<2x256xf32>
    %133 = math.exp %132 : vector<2x256xf32>
    %cst_30 = arith.constant 1.000000e+00 : f32
    %134 = vector.broadcast %cst_30 : f32 to vector<2x256xf32>
    %135 = arith.addf %134, %133 : vector<2x256xf32>
    %136 = arith.divf %134, %135 : vector<2x256xf32>
    %137 = vector.extract_strided_slice %136 {offsets = [0, 0], sizes = [2, 64], strides = [1, 1]} : vector<2x256xf32> to vector<2x64xf32>
    %138 = vector.extract_strided_slice %136 {offsets = [0, 64], sizes = [2, 64], strides = [1, 1]} : vector<2x256xf32> to vector<2x64xf32>
    %139 = vector.extract_strided_slice %136 {offsets = [0, 128], sizes = [2, 64], strides = [1, 1]} : vector<2x256xf32> to vector<2x64xf32>
    %140 = vector.extract_strided_slice %136 {offsets = [0, 192], sizes = [2, 64], strides = [1, 1]} : vector<2x256xf32> to vector<2x64xf32>
    %cst_31 = arith.constant 2.000000e+00 : f32
    %141 = vector.broadcast %cst_31 : f32 to vector<2x64xf32>
    %142 = arith.mulf %141, %140 : vector<2x64xf32>
    %cst_32 = arith.constant 1.000000e+00 : f32
    %143 = vector.broadcast %cst_32 : f32 to vector<2x64xf32>
    %144 = arith.subf %142, %143 : vector<2x64xf32>
    %145 = arith.mulf %138, %124 : vector<2x64xf32>
    %146 = arith.mulf %137, %144 : vector<2x64xf32>
    %147 = arith.addf %145, %146 : vector<2x64xf32>
    %148 = math.tanh %147 : vector<2x64xf32>
    %149 = arith.mulf %139, %148 : vector<2x64xf32>
    %150 = arith.addf %127, %149 : vector<2x64xf32>
    %151 = vector.extract_strided_slice %7 {offsets = [0, 1536], sizes = [2, 256], strides = [1, 1]} : vector<2x2048xf32> to vector<2x256xf32>
    %152 = arith.truncf %149 : vector<2x64xf32> to vector<2x64xbf16>
    %cst_33 = arith.constant dense<0.000000e+00> : vector<2x256xf32>
    %153 = tpu.matmul %152, %9, %cst_33 {dimension_numbers = #tpu.dot_dimension_numbers<[1], [0], [0], [1], [0, 0, 1, 1], [], []>} : vector<2x64xbf16>, vector<64x256xbf16>, vector<2x256xf32> -> vector<2x256xf32>
    %154 = arith.addf %151, %153 : vector<2x256xf32>
    %155 = arith.negf %154 : vector<2x256xf32>
    %156 = math.exp %155 : vector<2x256xf32>
    %cst_34 = arith.constant 1.000000e+00 : f32
    %157 = vector.broadcast %cst_34 : f32 to vector<2x256xf32>
    %158 = arith.addf %157, %156 : vector<2x256xf32>
    %159 = arith.divf %157, %158 : vector<2x256xf32>
    %160 = vector.extract_strided_slice %159 {offsets = [0, 0], sizes = [2, 64], strides = [1, 1]} : vector<2x256xf32> to vector<2x64xf32>
    %161 = vector.extract_strided_slice %159 {offsets = [0, 64], sizes = [2, 64], strides = [1, 1]} : vector<2x256xf32> to vector<2x64xf32>
    %162 = vector.extract_strided_slice %159 {offsets = [0, 128], sizes = [2, 64], strides = [1, 1]} : vector<2x256xf32> to vector<2x64xf32>
    %163 = vector.extract_strided_slice %159 {offsets = [0, 192], sizes = [2, 64], strides = [1, 1]} : vector<2x256xf32> to vector<2x64xf32>
    %cst_35 = arith.constant 2.000000e+00 : f32
    %164 = vector.broadcast %cst_35 : f32 to vector<2x64xf32>
    %165 = arith.mulf %164, %163 : vector<2x64xf32>
    %cst_36 = arith.constant 1.000000e+00 : f32
    %166 = vector.broadcast %cst_36 : f32 to vector<2x64xf32>
    %167 = arith.subf %165, %166 : vector<2x64xf32>
    %168 = arith.mulf %161, %147 : vector<2x64xf32>
    %169 = arith.mulf %160, %167 : vector<2x64xf32>
    %170 = arith.addf %168, %169 : vector<2x64xf32>
    %171 = math.tanh %170 : vector<2x64xf32>
    %172 = arith.mulf %162, %171 : vector<2x64xf32>
    %173 = arith.addf %150, %172 : vector<2x64xf32>
    %174 = vector.extract_strided_slice %7 {offsets = [0, 1792], sizes = [2, 256], strides = [1, 1]} : vector<2x2048xf32> to vector<2x256xf32>
    %175 = arith.truncf %172 : vector<2x64xf32> to vector<2x64xbf16>
    %cst_37 = arith.constant dense<0.000000e+00> : vector<2x256xf32>
    %176 = tpu.matmul %175, %9, %cst_37 {dimension_numbers = #tpu.dot_dimension_numbers<[1], [0], [0], [1], [0, 0, 1, 1], [], []>} : vector<2x64xbf16>, vector<64x256xbf16>, vector<2x256xf32> -> vector<2x256xf32>
    %177 = arith.addf %174, %176 : vector<2x256xf32>
    %178 = arith.negf %177 : vector<2x256xf32>
    %179 = math.exp %178 : vector<2x256xf32>
    %cst_38 = arith.constant 1.000000e+00 : f32
    %180 = vector.broadcast %cst_38 : f32 to vector<2x256xf32>
    %181 = arith.addf %180, %179 : vector<2x256xf32>
    %182 = arith.divf %180, %181 : vector<2x256xf32>
    %183 = vector.extract_strided_slice %182 {offsets = [0, 0], sizes = [2, 64], strides = [1, 1]} : vector<2x256xf32> to vector<2x64xf32>
    %184 = vector.extract_strided_slice %182 {offsets = [0, 64], sizes = [2, 64], strides = [1, 1]} : vector<2x256xf32> to vector<2x64xf32>
    %185 = vector.extract_strided_slice %182 {offsets = [0, 128], sizes = [2, 64], strides = [1, 1]} : vector<2x256xf32> to vector<2x64xf32>
    %186 = vector.extract_strided_slice %182 {offsets = [0, 192], sizes = [2, 64], strides = [1, 1]} : vector<2x256xf32> to vector<2x64xf32>
    %cst_39 = arith.constant 2.000000e+00 : f32
    %187 = vector.broadcast %cst_39 : f32 to vector<2x64xf32>
    %188 = arith.mulf %187, %186 : vector<2x64xf32>
    %cst_40 = arith.constant 1.000000e+00 : f32
    %189 = vector.broadcast %cst_40 : f32 to vector<2x64xf32>
    %190 = arith.subf %188, %189 : vector<2x64xf32>
    %191 = arith.mulf %184, %170 : vector<2x64xf32>
    %192 = arith.mulf %183, %190 : vector<2x64xf32>
    %193 = arith.addf %191, %192 : vector<2x64xf32>
    %194 = math.tanh %193 : vector<2x64xf32>
    %195 = arith.mulf %185, %194 : vector<2x64xf32>
    %196 = arith.addf %173, %195 : vector<2x64xf32>
    %cst_41 = arith.constant 1.250000e-01 : f32
    %197 = vector.broadcast %cst_41 : f32 to vector<2x64xf32>
    %198 = arith.mulf %196, %197 : vector<2x64xf32>
    %c0_42 = arith.constant 0 : index
    %c0_43 = arith.constant 0 : index
    %199 = vector.load %arg3[%c0_42, %c0_43] : memref<195x64xf32, #tpu.memory_space<vmem>>, vector<64x64xf32>
    %c64 = arith.constant 64 : index
    %c0_44 = arith.constant 0 : index
    %200 = vector.load %arg3[%c64, %c0_44] : memref<195x64xf32, #tpu.memory_space<vmem>>, vector<64x64xf32>
    %c128 = arith.constant 128 : index
    %c0_45 = arith.constant 0 : index
    %201 = vector.load %arg3[%c128, %c0_45] : memref<195x64xf32, #tpu.memory_space<vmem>>, vector<64x64xf32>
    %c192 = arith.constant 192 : index
    %c0_46 = arith.constant 0 : index
    %202 = vector.load %arg3[%c192, %c0_46] : memref<195x64xf32, #tpu.memory_space<vmem>>, vector<3x64xf32>
    %203 = vector.extract_strided_slice %202 {offsets = [0, 0], sizes = [1, 64], strides = [1, 1]} : vector<3x64xf32> to vector<1x64xf32>
    %204 = vector.extract_strided_slice %202 {offsets = [1, 0], sizes = [1, 64], strides = [1, 1]} : vector<3x64xf32> to vector<1x64xf32>
    %205 = vector.extract_strided_slice %202 {offsets = [2, 0], sizes = [1, 64], strides = [1, 1]} : vector<3x64xf32> to vector<1x64xf32>
    %cst_47 = arith.constant dense<0.000000e+00> : vector<2x64xf32>
    %206 = tpu.matmul %198, %199, %cst_47 {dimension_numbers = #tpu.dot_dimension_numbers<[1], [0], [0], [1], [0, 0, 1, 1], [], []>} : vector<2x64xf32>, vector<64x64xf32>, vector<2x64xf32> -> vector<2x64xf32>
    %207 = vector.broadcast %203 : vector<1x64xf32> to vector<2x64xf32>
    %208 = arith.addf %206, %207 : vector<2x64xf32>
    %209 = arith.mulf %195, %208 : vector<2x64xf32>
    %cst_48 = arith.constant dense<0.000000e+00> : vector<2x64xf32>
    %210 = tpu.matmul %209, %200, %cst_48 {dimension_numbers = #tpu.dot_dimension_numbers<[1], [0], [0], [1], [0, 0, 1, 1], [], []>} : vector<2x64xf32>, vector<64x64xf32>, vector<2x64xf32> -> vector<2x64xf32>
    %211 = vector.broadcast %204 : vector<1x64xf32> to vector<2x64xf32>
    %212 = arith.addf %210, %211 : vector<2x64xf32>
    %cst_49 = arith.constant 0.000000e+00 : f32
    %213 = vector.broadcast %cst_49 : f32 to vector<2x64xf32>
    %214 = arith.maximumf %212, %213 : vector<2x64xf32>
    %cst_50 = arith.constant dense<0.000000e+00> : vector<2x64xf32>
    %215 = tpu.matmul %214, %201, %cst_50 {dimension_numbers = #tpu.dot_dimension_numbers<[1], [0], [0], [1], [0, 0, 1, 1], [], []>} : vector<2x64xf32>, vector<64x64xf32>, vector<2x64xf32> -> vector<2x64xf32>
    %216 = vector.broadcast %205 : vector<1x64xf32> to vector<2x64xf32>
    %217 = arith.addf %215, %216 : vector<2x64xf32>
    %218 = vector.extract_strided_slice %217 {offsets = [0, 0], sizes = [2, 5], strides = [1, 1]} : vector<2x64xf32> to vector<2x5xf32>
    %c0_51 = arith.constant 0 : index
    %c0_52 = arith.constant 0 : index
    %219 = vector.load %arg4[%c0_51, %c0_52] : memref<2x5xf32, #tpu.memory_space<vmem>>, vector<2x5xf32>
    tpu.vector_store %arg4[%c0_51, %c0_52], %218 {strides = array<i32>} : memref<2x5xf32, #tpu.memory_space<vmem>>, vector<2x5xf32>,
    return
  }
}

</mosaic_0001>

<llo_original>
// kernel: run_model.1
$region0: #{run_model.1}
  #allocation0 [shape = 'u32[]', space=smem, size = 0x4, offset = 0x4, fixed_abs, tag = 'smem constant byte address 0x4 - core index']
  #allocation1 [shape = 'u32[144,128]{1,0:T(1,128)}', space=vmem, size = 0x12000, scoped, tag = 'internal scratch']
  %s0 = inlined_call_operand.vmem [shape: f32[2,32], index: 0, kind: input, shape index: {}]
  %s1 = inlined_call_operand.hbm [shape: f32[33,2048], index: 1, kind: input, shape index: {}]
  %s2 = inlined_call_operand.vmem [shape: f32[64,256], index: 2, kind: input, shape index: {}]
  %s3 = inlined_call_operand.vmem [shape: f32[195,64], index: 3, kind: input, shape index: {}]
  %s4 = inlined_call_operand.hbm [shape: f32[2,5], index: 4, kind: output, shape index: {}]
  %s5 = sld [smem:[#allocation0]]
  $region30: #{run_model.1} parent=0
    _
  %s7 = ssub.s32 1, %s5
  %s8 = scalar_select 0, %s7, %s5
  $region1: #{run_model.1} parent=0
    #allocation2 [shape = 'u8[327680]{0}', space=vmem, size = 0x50000, scoped, tag = 'input window, operand 1, single buffered']
    #allocation3 [shape = 's32[1]{0}', space=sflag, size = 0x4, scoped, tag = 'scoped memory for run_model.1']
    #allocation4 [shape = 's32[1]{0}', space=sflag, size = 0x4, scoped, tag = 'scoped memory for run_model.1']
    #allocation5 [shape = 'u8[1024]{0}', space=vmem, size = 0x400, scoped, tag = 'output window, operand 0, single buffered']
    %9 = vsyncpa [#allocation3], 0
    %10 = vsyncpa [#allocation4], 0
    // Predicated region
    $region2: #{run_model.1} parent=1 // pred_check
      _
    $region3: #{run_model.1} parent=1 // pred_check_branch
      %12 = sbr.rel (0) target = $region5
    $region4: #{run_model.1} parent=1 // pred_region
      _
    $region5: #{run_model.1} parent=1 // pred_fallthru
      _
    // Predicated region
    $region6: #{run_model.1} parent=1 // pred_check
      _
    $region7: #{run_model.1} parent=1 // pred_check_branch
      %14 = sbr.rel (0) target = $region9
    $region8: #{run_model.1} parent=1 // pred_region
      %s16 = ssub.s32 10240, 10240
      %17 = vsyncadd [#allocation3], %s16
      %s18 = sshll.u32 [#allocation2], 4
      %s19 = int_to_ptr.vmem [resolvable:$true] %s18
      %24 = dma.hbm_to_vmem [thread:$0]  %s1, 10240, %s19, [#allocation3], 2048, 2048, 128
    $region9: #{run_model.1} parent=1 // pred_fallthru
      _
    // Predicated region
    $region10: #{run_model.1} parent=1 // pred_check
      _
    $region11: #{run_model.1} parent=1 // pred_check_branch
      %26 = sbr.rel (0) target = $region13
    $region12: #{run_model.1} parent=1 // pred_region
      _
    $region13: #{run_model.1} parent=1 // pred_fallthru
      _
    // Predicated region
    $region14: #{run_model.1} parent=1 // pred_check
      _
    $region15: #{run_model.1} parent=1 // pred_check_branch
      %28 = sbr.rel (0) target = $region17
    $region16: #{run_model.1} parent=1 // pred_region
      _
    $region17: #{run_model.1} parent=1 // pred_fallthru
      _
    // Predicated region
    $region18: #{run_model.1} parent=1 // pred_check
      _
    $region19: #{run_model.1} parent=1 // pred_check_branch
      %30 = sbr.rel (0) target = $region21
    $region20: #{run_model.1} parent=1 // pred_region
      %31 = dma.done [#allocation3], 10240
    $region21: #{run_model.1} parent=1 // pred_fallthru
      _
    %v33 = vld [vmem:[#allocation2] sm:$0xff]
    %v34 = vld [vmem:[#allocation2 + $0x8] sm:$0xff]
    %v35 = vld [vmem:[#allocation2 + $0x10] sm:$0xff]
    %v36 = vld [vmem:[#allocation2 + $0x18] sm:$0xff]
    %v37 = vld [vmem:[#allocation2 + $0x20] sm:$0xff]
    %v38 = vld [vmem:[#allocation2 + $0x28] sm:$0xff]
    %v39 = vld [vmem:[#allocation2 + $0x30] sm:$0xff]
    %v40 = vld [vmem:[#allocation2 + $0x38] sm:$0xff]
    %v41 = vld [vmem:[#allocation2 + $0x40] sm:$0xff]
    %v42 = vld [vmem:[#allocation2 + $0x48] sm:$0xff]
    %v43 = vld [vmem:[#allocation2 + $0x50] sm:$0xff]
    %v44 = vld [vmem:[#allocation2 + $0x58] sm:$0xff]
    %v45 = vld [vmem:[#allocation2 + $0x60] sm:$0xff]
    %v46 = vld [vmem:[#allocation2 + $0x68] sm:$0xff]
    %v47 = vld [vmem:[#allocation2 + $0x70] sm:$0xff]
    %v48 = vld [vmem:[#allocation2 + $0x78] sm:$0xff]
    %v49 = vld [vmem:[#allocation2 + $0x80] sm:$0xff]
    %v50 = vld [vmem:[#allocation2 + $0x88] sm:$0xff]
    %v51 = vld [vmem:[#allocation2 + $0x90] sm:$0xff]
    %v52 = vld [vmem:[#allocation2 + $0x98] sm:$0xff]
    %v53 = vld [vmem:[#allocation2 + $0xa0] sm:$0xff]
    %v54 = vld [vmem:[#allocation2 + $0xa8] sm:$0xff]
    %v55 = vld [vmem:[#allocation2 + $0xb0] sm:$0xff]
    %v56 = vld [vmem:[#allocation2 + $0xb8] sm:$0xff]
    %v57 = vld [vmem:[#allocation2 + $0xc0] sm:$0xff]
    %v58 = vld [vmem:[#allocation2 + $0xc8] sm:$0xff]
    %v59 = vld [vmem:[#allocation2 + $0xd0] sm:$0xff]
    %v60 = vld [vmem:[#allocation2 + $0xd8] sm:$0xff]
    %v61 = vld [vmem:[#allocation2 + $0xe0] sm:$0xff]
    %v62 = vld [vmem:[#allocation2 + $0xe8] sm:$0xff]
    %v63 = vld [vmem:[#allocation2 + $0xf0] sm:$0xff]
    %v64 = vld [vmem:[#allocation2 + $0xf8] sm:$0xff]
    %v65 = vld [vmem:[#allocation2 + $0x100] sm:$0xff]
    %v66 = vld [vmem:[#allocation2 + $0x108] sm:$0xff]
    %v67 = vld [vmem:[#allocation2 + $0x110] sm:$0xff]
    %v68 = vld [vmem:[#allocation2 + $0x118] sm:$0xff]
    %v69 = vld [vmem:[#allocation2 + $0x120] sm:$0xff]
    %v70 = vld [vmem:[#allocation2 + $0x128] sm:$0xff]
    %v71 = vld [vmem:[#allocation2 + $0x130] sm:$0xff]
    %v72 = vld [vmem:[#allocation2 + $0x138] sm:$0xff]
    %v73 = vld [vmem:[#allocation2 + $0x140] sm:$0xff]
    %v74 = vld [vmem:[#allocation2 + $0x148] sm:$0xff]
    %v75 = vld [vmem:[#allocation2 + $0x150] sm:$0xff]
    %v76 = vld [vmem:[#allocation2 + $0x158] sm:$0xff]
    %v77 = vld [vmem:[#allocation2 + $0x160] sm:$0xff]
    %v78 = vld [vmem:[#allocation2 + $0x168] sm:$0xff]
    %v79 = vld [vmem:[#allocation2 + $0x170] sm:$0xff]
    %v80 = vld [vmem:[#allocation2 + $0x178] sm:$0xff]
    %v81 = vld [vmem:[#allocation2 + $0x180] sm:$0xff]
    %v82 = vld [vmem:[#allocation2 + $0x188] sm:$0xff]
    %v83 = vld [vmem:[#allocation2 + $0x190] sm:$0xff]
    %v84 = vld [vmem:[#allocation2 + $0x198] sm:$0xff]
    %v85 = vld [vmem:[#allocation2 + $0x1a0] sm:$0xff]
    %v86 = vld [vmem:[#allocation2 + $0x1a8] sm:$0xff]
    %v87 = vld [vmem:[#allocation2 + $0x1b0] sm:$0xff]
    %v88 = vld [vmem:[#allocation2 + $0x1b8] sm:$0xff]
    %v89 = vld [vmem:[#allocation2 + $0x1c0] sm:$0xff]
    %v90 = vld [vmem:[#allocation2 + $0x1c8] sm:$0xff]
    %v91 = vld [vmem:[#allocation2 + $0x1d0] sm:$0xff]
    %v92 = vld [vmem:[#allocation2 + $0x1d8] sm:$0xff]
    %v93 = vld [vmem:[#allocation2 + $0x1e0] sm:$0xff]
    %v94 = vld [vmem:[#allocation2 + $0x1e8] sm:$0xff]
    %v95 = vld [vmem:[#allocation2 + $0x1f0] sm:$0xff]
    %v96 = vld [vmem:[#allocation2 + $0x1f8] sm:$0xff]
    %v97 = vpack.c.bf16 %v49, %v33
    %v98 = vpack.c.bf16 %v50, %v34
    %v99 = vpack.c.bf16 %v51, %v35
    %v100 = vpack.c.bf16 %v52, %v36
    %v101 = vpack.c.bf16 %v53, %v37
    %v102 = vpack.c.bf16 %v54, %v38
    %v103 = vpack.c.bf16 %v55, %v39
    %v104 = vpack.c.bf16 %v56, %v40
    %v105 = vpack.c.bf16 %v57, %v41
    %v106 = vpack.c.bf16 %v58, %v42
    %v107 = vpack.c.bf16 %v59, %v43
    %v108 = vpack.c.bf16 %v60, %v44
    %v109 = vpack.c.bf16 %v61, %v45
    %v110 = vpack.c.bf16 %v62, %v46
    %v111 = vpack.c.bf16 %v63, %v47
    %v112 = vpack.c.bf16 %v64, %v48
    %v113 = vpack.c.bf16 %v81, %v65
    %v114 = vpack.c.bf16 %v82, %v66
    %v115 = vpack.c.bf16 %v83, %v67
    %v116 = vpack.c.bf16 %v84, %v68
    %v117 = vpack.c.bf16 %v85, %v69
    %v118 = vpack.c.bf16 %v86, %v70
    %v119 = vpack.c.bf16 %v87, %v71
    %v120 = vpack.c.bf16 %v88, %v72
    %v121 = vpack.c.bf16 %v89, %v73
    %v122 = vpack.c.bf16 %v90, %v74
    %v123 = vpack.c.bf16 %v91, %v75
    %v124 = vpack.c.bf16 %v92, %v76
    %v125 = vpack.c.bf16 %v93, %v77
    %v126 = vpack.c.bf16 %v94, %v78
    %v127 = vpack.c.bf16 %v95, %v79
    %v128 = vpack.c.bf16 %v96, %v80
    %s129 = scalar_lea.vmem [#allocation2], 512
    %v130 = vld [vmem:[%s129] ss:$8 sm:$0xf]
    %v131 = vld [vmem:[%s129] ss:$8 sm:$0xf0]
    %v132 = vor.u32 %v130, %v131
    %s133 = scalar_lea.vmem [#allocation2], 576
    %v134 = vld [vmem:[%s133] ss:$8 sm:$0xf]
    %v135 = vld [vmem:[%s133] ss:$8 sm:$0xf0]
    %v136 = vor.u32 %v134, %v135
    %v137 = vld [vmem:[%s0] sm:$0x3]
    %v138 = vpack.c.bf16 %v137, %v137
    %v141 = vlaneseq
    %v142 = vshrl.u32 %v141, 7
    %v143 = vsub.s32 0, %v142
    %v144 = vrot.slane %v132, %v143
    %v145 = vlaneseq
    %v146 = vshrl.u32 %v145, 7
    %v147 = vsub.s32 1, %v146
    %v148 = vrot.slane %v132, %v147
    %v149 = vlaneseq
    %v150 = vshrl.u32 %v149, 7
    %v151 = vsub.s32 2, %v150
    %v152 = vrot.slane %v132, %v151
    %v153 = vlaneseq
    %v154 = vshrl.u32 %v153, 7
    %v155 = vsub.s32 3, %v154
    %v156 = vrot.slane %v132, %v155
    %v157 = vlaneseq
    %v158 = vshrl.u32 %v157, 7
    %v159 = vsub.s32 4, %v158
    %v160 = vrot.slane %v132, %v159
    %v161 = vlaneseq
    %v162 = vshrl.u32 %v161, 7
    %v163 = vsub.s32 5, %v162
    %v164 = vrot.slane %v132, %v163
    %v165 = vlaneseq
    %v166 = vshrl.u32 %v165, 7
    %v167 = vsub.s32 6, %v166
    %v168 = vrot.slane %v132, %v167
    %v169 = vlaneseq
    %v170 = vshrl.u32 %v169, 7
    %v171 = vsub.s32 7, %v170
    %v172 = vrot.slane %v132, %v171
    %v173 = vlaneseq
    %v174 = vshrl.u32 %v173, 7
    %v175 = vsub.s32 0, %v174
    %v176 = vrot.slane %v136, %v175
    %v177 = vlaneseq
    %v178 = vshrl.u32 %v177, 7
    %v179 = vsub.s32 1, %v178
    %v180 = vrot.slane %v136, %v179
    %v181 = vlaneseq
    %v182 = vshrl.u32 %v181, 7
    %v183 = vsub.s32 2, %v182
    %v184 = vrot.slane %v136, %v183
    %v185 = vlaneseq
    %v186 = vshrl.u32 %v185, 7
    %v187 = vsub.s32 3, %v186
    %v188 = vrot.slane %v136, %v187
    %v189 = vlaneseq
    %v190 = vshrl.u32 %v189, 7
    %v191 = vsub.s32 4, %v190
    %v192 = vrot.slane %v136, %v191
    %v193 = vlaneseq
    %v194 = vshrl.u32 %v193, 7
    %v195 = vsub.s32 5, %v194
    %v196 = vrot.slane %v136, %v195
    %v197 = vlaneseq
    %v198 = vshrl.u32 %v197, 7
    %v199 = vsub.s32 6, %v198
    %v200 = vrot.slane %v136, %v199
    %v201 = vlaneseq
    %v202 = vshrl.u32 %v201, 7
    %v203 = vsub.s32 7, %v202
    %v204 = vrot.slane %v136, %v203
    %vm221 = vcmask 261120
    %v223 = vsel %vm221, %v138, 0
    %225 = vmatprep.subr.bf16.mxu0 %v98
    %226 = vmatpush1.bf16.msra.mxu0 %v97
    %227 = vmatprep.subr.bf16.mxu0 %v114
    %228 = vmatpush1.bf16.msra.mxu0 %v113
    %229 = vmatprep.subr.bf16.mxu0 0
    %230 = vmatpush1.bf16.msra.mxu0 0
    %231 = vmatprep.subr.bf16.mxu0 0
    %232 = vmatpush1.bf16.msra.mxu0 0
    %233 = vmatprep.subr.bf16.mxu0 0
    %234 = vmatpush1.bf16.msra.mxu0 0
    %235 = vmatprep.subr.bf16.mxu0 0
    %236 = vmatpush1.bf16.msra.mxu0 0
    %237 = vmatprep.subr.bf16.mxu0 0
    %238 = vmatpush1.bf16.msra.mxu0 0
    %239 = vmatprep.subr.bf16.mxu0 0
    %240 = vmatpush1.bf16.msra.mxu0 0
    %241 = vmatprep.subr.bf16.mxu0 0
    %242 = vmatpush1.bf16.msra.mxu0 0
    %243 = vmatprep.subr.bf16.mxu0 0
    %244 = vmatpush1.bf16.msra.mxu0 0
    %245 = vmatprep.subr.bf16.mxu0 0
    %246 = vmatpush1.bf16.msra.mxu0 0
    %247 = vmatprep.subr.bf16.mxu0 0
    %248 = vmatpush1.bf16.msra.mxu0 0
    %249 = vmatprep.subr.bf16.mxu0 0
    %250 = vmatpush1.bf16.msra.mxu0 0
    %251 = vmatprep.subr.bf16.mxu0 0
    %252 = vmatpush1.bf16.msra.mxu0 0
    %253 = vmatprep.subr.bf16.mxu0 0
    %254 = vmatpush1.bf16.msra.mxu0 0
    %255 = vmatprep.subr.bf16.mxu0 0
    %256 = vmatpush1.bf16.msra.mxu0 0
    %257 = vmatprep.mubr.bf16.mxu0 0
    %258 = vmatmul.mubr.bf16.gmra.mrb[0].mxu0 %v223
    %v259 = vpop.f32.mrb[0].mxu0
    %v260 = vadd.f32 %v144, %v259
    %v261 = vpop.f32.mrb[0].mxu0
    %v262 = vadd.f32 %v148, %v261
    %v263 = vpop.f32.mrb[0].mxu0
    %v264 = vpop.f32.mrb[0].mxu0
    %265 = vdwg.mxu0
    %266 = vmatprep.subr.bf16.mxu0 %v100
    %267 = vmatpush1.bf16.msra.mxu0 %v99
    %268 = vmatprep.subr.bf16.mxu0 %v116
    %269 = vmatpush1.bf16.msra.mxu0 %v115
    %270 = vmatprep.subr.bf16.mxu0 0
    %271 = vmatpush1.bf16.msra.mxu0 0
    %272 = vmatprep.subr.bf16.mxu0 0
    %273 = vmatpush1.bf16.msra.mxu0 0
    %274 = vmatprep.subr.bf16.mxu0 0
    %275 = vmatpush1.bf16.msra.mxu0 0
    %276 = vmatprep.subr.bf16.mxu0 0
    %277 = vmatpush1.bf16.msra.mxu0 0
    %278 = vmatprep.subr.bf16.mxu0 0
    %279 = vmatpush1.bf16.msra.mxu0 0
    %280 = vmatprep.subr.bf16.mxu0 0
    %281 = vmatpush1.bf16.msra.mxu0 0
    %282 = vmatprep.subr.bf16.mxu0 0
    %283 = vmatpush1.bf16.msra.mxu0 0
    %284 = vmatprep.subr.bf16.mxu0 0
    %285 = vmatpush1.bf16.msra.mxu0 0
    %286 = vmatprep.subr.bf16.mxu0 0
    %287 = vmatpush1.bf16.msra.mxu0 0
    %288 = vmatprep.subr.bf16.mxu0 0
    %289 = vmatpush1.bf16.msra.mxu0 0
    %290 = vmatprep.subr.bf16.mxu0 0
    %291 = vmatpush1.bf16.msra.mxu0 0
    %292 = vmatprep.subr.bf16.mxu0 0
    %293 = vmatpush1.bf16.msra.mxu0 0
    %294 = vmatprep.subr.bf16.mxu0 0
    %295 = vmatpush1.bf16.msra.mxu0 0
    %296 = vmatprep.subr.bf16.mxu0 0
    %297 = vmatpush1.bf16.msra.mxu0 0
    %298 = vmatprep.mubr.bf16.mxu0 0
    %299 = vmatmul.mubr.bf16.gmra.mrb[0].mxu0 %v223
    %v300 = vpop.f32.mrb[0].mxu0
    %v301 = vadd.f32 %v152, %v300
    %v302 = vpop.f32.mrb[0].mxu0
    %v303 = vadd.f32 %v156, %v302
    %v304 = vpop.f32.mrb[0].mxu0
    %v305 = vpop.f32.mrb[0].mxu0
    %306 = vdwg.mxu0
    %307 = vmatprep.subr.bf16.mxu0 %v102
    %308 = vmatpush1.bf16.msra.mxu0 %v101
    %309 = vmatprep.subr.bf16.mxu0 %v118
    %310 = vmatpush1.bf16.msra.mxu0 %v117
    %311 = vmatprep.subr.bf16.mxu0 0
    %312 = vmatpush1.bf16.msra.mxu0 0
    %313 = vmatprep.subr.bf16.mxu0 0
    %314 = vmatpush1.bf16.msra.mxu0 0
    %315 = vmatprep.subr.bf16.mxu0 0
    %316 = vmatpush1.bf16.msra.mxu0 0
    %317 = vmatprep.subr.bf16.mxu0 0
    %318 = vmatpush1.bf16.msra.mxu0 0
    %319 = vmatprep.subr.bf16.mxu0 0
    %320 = vmatpush1.bf16.msra.mxu0 0
    %321 = vmatprep.subr.bf16.mxu0 0
    %322 = vmatpush1.bf16.msra.mxu0 0
    %323 = vmatprep.subr.bf16.mxu0 0
    %324 = vmatpush1.bf16.msra.mxu0 0
    %325 = vmatprep.subr.bf16.mxu0 0
    %326 = vmatpush1.bf16.msra.mxu0 0
    %327 = vmatprep.subr.bf16.mxu0 0
    %328 = vmatpush1.bf16.msra.mxu0 0
    %329 = vmatprep.subr.bf16.mxu0 0
    %330 = vmatpush1.bf16.msra.mxu0 0
    %331 = vmatprep.subr.bf16.mxu0 0
    %332 = vmatpush1.bf16.msra.mxu0 0
    %333 = vmatprep.subr.bf16.mxu0 0
    %334 = vmatpush1.bf16.msra.mxu0 0
    %335 = vmatprep.subr.bf16.mxu0 0
    %336 = vmatpush1.bf16.msra.mxu0 0
    %337 = vmatprep.subr.bf16.mxu0 0
    %338 = vmatpush1.bf16.msra.mxu0 0
    %339 = vmatprep.mubr.bf16.mxu0 0
    %340 = vmatmul.mubr.bf16.gmra.mrb[0].mxu0 %v223
    %v341 = vpop.f32.mrb[0].mxu0
    %v342 = vadd.f32 %v160, %v341
    %v343 = vpop.f32.mrb[0].mxu0
    %v344 = vadd.f32 %v164, %v343
    %v345 = vpop.f32.mrb[0].mxu0
    %v346 = vpop.f32.mrb[0].mxu0
    %347 = vdwg.mxu0
    %348 = vmatprep.subr.bf16.mxu0 %v104
    %349 = vmatpush1.bf16.msra.mxu0 %v103
    %350 = vmatprep.subr.bf16.mxu0 %v120
    %351 = vmatpush1.bf16.msra.mxu0 %v119
    %352 = vmatprep.subr.bf16.mxu0 0
    %353 = vmatpush1.bf16.msra.mxu0 0
    %354 = vmatprep.subr.bf16.mxu0 0
    %355 = vmatpush1.bf16.msra.mxu0 0
    %356 = vmatprep.subr.bf16.mxu0 0
    %357 = vmatpush1.bf16.msra.mxu0 0
    %358 = vmatprep.subr.bf16.mxu0 0
    %359 = vmatpush1.bf16.msra.mxu0 0
    %360 = vmatprep.subr.bf16.mxu0 0
    %361 = vmatpush1.bf16.msra.mxu0 0
    %362 = vmatprep.subr.bf16.mxu0 0
    %363 = vmatpush1.bf16.msra.mxu0 0
    %364 = vmatprep.subr.bf16.mxu0 0
    %365 = vmatpush1.bf16.msra.mxu0 0
    %366 = vmatprep.subr.bf16.mxu0 0
    %367 = vmatpush1.bf16.msra.mxu0 0
    %368 = vmatprep.subr.bf16.mxu0 0
    %369 = vmatpush1.bf16.msra.mxu0 0
    %370 = vmatprep.subr.bf16.mxu0 0
    %371 = vmatpush1.bf16.msra.mxu0 0
    %372 = vmatprep.subr.bf16.mxu0 0
    %373 = vmatpush1.bf16.msra.mxu0 0
    %374 = vmatprep.subr.bf16.mxu0 0
    %375 = vmatpush1.bf16.msra.mxu0 0
    %376 = vmatprep.subr.bf16.mxu0 0
    %377 = vmatpush1.bf16.msra.mxu0 0
    %378 = vmatprep.subr.bf16.mxu0 0
    %379 = vmatpush1.bf16.msra.mxu0 0
    %380 = vmatprep.mubr.bf16.mxu0 0
    %381 = vmatmul.mubr.bf16.gmra.mrb[0].mxu0 %v223
    %v382 = vpop.f32.mrb[0].mxu0
    %v383 = vadd.f32 %v168, %v382
    %v384 = vpop.f32.mrb[0].mxu0
    %v385 = vadd.f32 %v172, %v384
    %v386 = vpop.f32.mrb[0].mxu0
    %v387 = vpop.f32.mrb[0].mxu0
    %388 = vdwg.mxu0
    %389 = vmatprep.subr.bf16.mxu0 %v106
    %390 = vmatpush1.bf16.msra.mxu0 %v105
    %391 = vmatprep.subr.bf16.mxu0 %v122
    %392 = vmatpush1.bf16.msra.mxu0 %v121
    %393 = vmatprep.subr.bf16.mxu0 0
    %394 = vmatpush1.bf16.msra.mxu0 0
    %395 = vmatprep.subr.bf16.mxu0 0
    %396 = vmatpush1.bf16.msra.mxu0 0
    %397 = vmatprep.subr.bf16.mxu0 0
    %398 = vmatpush1.bf16.msra.mxu0 0
    %399 = vmatprep.subr.bf16.mxu0 0
    %400 = vmatpush1.bf16.msra.mxu0 0
    %401 = vmatprep.subr.bf16.mxu0 0
    %402 = vmatpush1.bf16.msra.mxu0 0
    %403 = vmatprep.subr.bf16.mxu0 0
    %404 = vmatpush1.bf16.msra.mxu0 0
    %405 = vmatprep.subr.bf16.mxu0 0
    %406 = vmatpush1.bf16.msra.mxu0 0
    %407 = vmatprep.subr.bf16.mxu0 0
    %408 = vmatpush1.bf16.msra.mxu0 0
    %409 = vmatprep.subr.bf16.mxu0 0
    %410 = vmatpush1.bf16.msra.mxu0 0
    %411 = vmatprep.subr.bf16.mxu0 0
    %412 = vmatpush1.bf16.msra.mxu0 0
    %413 = vmatprep.subr.bf16.mxu0 0
    %414 = vmatpush1.bf16.msra.mxu0 0
    %415 = vmatprep.subr.bf16.mxu0 0
    %416 = vmatpush1.bf16.msra.mxu0 0
    %417 = vmatprep.subr.bf16.mxu0 0
    %418 = vmatpush1.bf16.msra.mxu0 0
    %419 = vmatprep.subr.bf16.mxu0 0
    %420 = vmatpush1.bf16.msra.mxu0 0
    %421 = vmatprep.mubr.bf16.mxu0 0
    %422 = vmatmul.mubr.bf16.gmra.mrb[0].mxu0 %v223
    %v423 = vpop.f32.mrb[0].mxu0
    %v424 = vadd.f32 %v176, %v423
    %v425 = vpop.f32.mrb[0].mxu0
    %v426 = vadd.f32 %v180, %v425
    %v427 = vpop.f32.mrb[0].mxu0
    %v428 = vpop.f32.mrb[0].mxu0
    %429 = vdwg.mxu0
    %430 = vmatprep.subr.bf16.mxu0 %v108
    %431 = vmatpush1.bf16.msra.mxu0 %v107
    %432 = vmatprep.subr.bf16.mxu0 %v124
    %433 = vmatpush1.bf16.msra.mxu0 %v123
    %434 = vmatprep.subr.bf16.mxu0 0
    %435 = vmatpush1.bf16.msra.mxu0 0
    %436 = vmatprep.subr.bf16.mxu0 0
    %437 = vmatpush1.bf16.msra.mxu0 0
    %438 = vmatprep.subr.bf16.mxu0 0
    %439 = vmatpush1.bf16.msra.mxu0 0
    %440 = vmatprep.subr.bf16.mxu0 0
    %441 = vmatpush1.bf16.msra.mxu0 0
    %442 = vmatprep.subr.bf16.mxu0 0
    %443 = vmatpush1.bf16.msra.mxu0 0
    %444 = vmatprep.subr.bf16.mxu0 0
    %445 = vmatpush1.bf16.msra.mxu0 0
    %446 = vmatprep.subr.bf16.mxu0 0
    %447 = vmatpush1.bf16.msra.mxu0 0
    %448 = vmatprep.subr.bf16.mxu0 0
    %449 = vmatpush1.bf16.msra.mxu0 0
    %450 = vmatprep.subr.bf16.mxu0 0
    %451 = vmatpush1.bf16.msra.mxu0 0
    %452 = vmatprep.subr.bf16.mxu0 0
    %453 = vmatpush1.bf16.msra.mxu0 0
    %454 = vmatprep.subr.bf16.mxu0 0
    %455 = vmatpush1.bf16.msra.mxu0 0
    %456 = vmatprep.subr.bf16.mxu0 0
    %457 = vmatpush1.bf16.msra.mxu0 0
    %458 = vmatprep.subr.bf16.mxu0 0
    %459 = vmatpush1.bf16.msra.mxu0 0
    %460 = vmatprep.subr.bf16.mxu0 0
    %461 = vmatpush1.bf16.msra.mxu0 0
    %462 = vmatprep.mubr.bf16.mxu0 0
    %463 = vmatmul.mubr.bf16.gmra.mrb[0].mxu0 %v223
    %v464 = vpop.f32.mrb[0].mxu0
    %v465 = vadd.f32 %v184, %v464
    %v466 = vpop.f32.mrb[0].mxu0
    %v467 = vadd.f32 %v188, %v466
    %v468 = vpop.f32.mrb[0].mxu0
    %v469 = vpop.f32.mrb[0].mxu0
    %470 = vdwg.mxu0
    %471 = vmatprep.subr.bf16.mxu0 %v110
    %472 = vmatpush1.bf16.msra.mxu0 %v109
    %473 = vmatprep.subr.bf16.mxu0 %v126
    %474 = vmatpush1.bf16.msra.mxu0 %v125
    %475 = vmatprep.subr.bf16.mxu0 0
    %476 = vmatpush1.bf16.msra.mxu0 0
    %477 = vmatprep.subr.bf16.mxu0 0
    %478 = vmatpush1.bf16.msra.mxu0 0
    %479 = vmatprep.subr.bf16.mxu0 0
    %480 = vmatpush1.bf16.msra.mxu0 0
    %481 = vmatprep.subr.bf16.mxu0 0
    %482 = vmatpush1.bf16.msra.mxu0 0
    %483 = vmatprep.subr.bf16.mxu0 0
    %484 = vmatpush1.bf16.msra.mxu0 0
    %485 = vmatprep.subr.bf16.mxu0 0
    %486 = vmatpush1.bf16.msra.mxu0 0
    %487 = vmatprep.subr.bf16.mxu0 0
    %488 = vmatpush1.bf16.msra.mxu0 0
    %489 = vmatprep.subr.bf16.mxu0 0
    %490 = vmatpush1.bf16.msra.mxu0 0
    %491 = vmatprep.subr.bf16.mxu0 0
    %492 = vmatpush1.bf16.msra.mxu0 0
    %493 = vmatprep.subr.bf16.mxu0 0
    %494 = vmatpush1.bf16.msra.mxu0 0
    %495 = vmatprep.subr.bf16.mxu0 0
    %496 = vmatpush1.bf16.msra.mxu0 0
    %497 = vmatprep.subr.bf16.mxu0 0
    %498 = vmatpush1.bf16.msra.mxu0 0
    %499 = vmatprep.subr.bf16.mxu0 0
    %500 = vmatpush1.bf16.msra.mxu0 0
    %501 = vmatprep.subr.bf16.mxu0 0
    %502 = vmatpush1.bf16.msra.mxu0 0
    %503 = vmatprep.mubr.bf16.mxu0 0
    %504 = vmatmul.mubr.bf16.gmra.mrb[0].mxu0 %v223
    %v505 = vpop.f32.mrb[0].mxu0
    %v506 = vadd.f32 %v192, %v505
    %v507 = vpop.f32.mrb[0].mxu0
    %v508 = vadd.f32 %v196, %v507
    %v509 = vpop.f32.mrb[0].mxu0
    %v510 = vpop.f32.mrb[0].mxu0
    %511 = vdwg.mxu0
    %512 = vmatprep.subr.bf16.mxu0 %v112
    %513 = vmatpush1.bf16.msra.mxu0 %v111
    %514 = vmatprep.subr.bf16.mxu0 %v128
    %515 = vmatpush1.bf16.msra.mxu0 %v127
    %516 = vmatprep.subr.bf16.mxu0 0
    %517 = vmatpush1.bf16.msra.mxu0 0
    %518 = vmatprep.subr.bf16.mxu0 0
    %519 = vmatpush1.bf16.msra.mxu0 0
    %520 = vmatprep.subr.bf16.mxu0 0
    %521 = vmatpush1.bf16.msra.mxu0 0
    %522 = vmatprep.subr.bf16.mxu0 0
    %523 = vmatpush1.bf16.msra.mxu0 0
    %524 = vmatprep.subr.bf16.mxu0 0
    %525 = vmatpush1.bf16.msra.mxu0 0
    %526 = vmatprep.subr.bf16.mxu0 0
    %527 = vmatpush1.bf16.msra.mxu0 0
    %528 = vmatprep.subr.bf16.mxu0 0
    %529 = vmatpush1.bf16.msra.mxu0 0
    %530 = vmatprep.subr.bf16.mxu0 0
    %531 = vmatpush1.bf16.msra.mxu0 0
    %532 = vmatprep.subr.bf16.mxu0 0
    %533 = vmatpush1.bf16.msra.mxu0 0
    %534 = vmatprep.subr.bf16.mxu0 0
    %535 = vmatpush1.bf16.msra.mxu0 0
    %536 = vmatprep.subr.bf16.mxu0 0
    %537 = vmatpush1.bf16.msra.mxu0 0
    %538 = vmatprep.subr.bf16.mxu0 0
    %539 = vmatpush1.bf16.msra.mxu0 0
    %540 = vmatprep.subr.bf16.mxu0 0
    %541 = vmatpush1.bf16.msra.mxu0 0
    %542 = vmatprep.subr.bf16.mxu0 0
    %543 = vmatpush1.bf16.msra.mxu0 0
    %544 = vmatprep.mubr.bf16.mxu0 0
    %545 = vmatmul.mubr.bf16.gmra.mrb[0].mxu0 %v223
    %v546 = vpop.f32.mrb[0].mxu0
    %v547 = vadd.f32 %v200, %v546
    %v548 = vpop.f32.mrb[0].mxu0
    %v549 = vadd.f32 %v204, %v548
    %v550 = vpop.f32.mrb[0].mxu0
    %v551 = vpop.f32.mrb[0].mxu0
    %552 = vdwg.mxu0
    %v553 = vld [vmem:[%s2] sm:$0xff]
    %v554 = vld [vmem:[%s2 + $0x8] sm:$0xff]
    %v555 = vld [vmem:[%s2 + $0x10] sm:$0xff]
    %v556 = vld [vmem:[%s2 + $0x18] sm:$0xff]
    %v557 = vld [vmem:[%s2 + $0x20] sm:$0xff]
    %v558 = vld [vmem:[%s2 + $0x28] sm:$0xff]
    %v559 = vld [vmem:[%s2 + $0x30] sm:$0xff]
    %v560 = vld [vmem:[%s2 + $0x38] sm:$0xff]
    %v561 = vld [vmem:[%s2 + $0x40] sm:$0xff]
    %v562 = vld [vmem:[%s2 + $0x48] sm:$0xff]
    %v563 = vld [vmem:[%s2 + $0x50] sm:$0xff]
    %v564 = vld [vmem:[%s2 + $0x58] sm:$0xff]
    %v565 = vld [vmem:[%s2 + $0x60] sm:$0xff]
    %v566 = vld [vmem:[%s2 + $0x68] sm:$0xff]
    %v567 = vld [vmem:[%s2 + $0x70] sm:$0xff]
    %v568 = vld [vmem:[%s2 + $0x78] sm:$0xff]
    %v569 = vpack.c.bf16 %v555, %v553
    %v570 = vpack.c.bf16 %v556, %v554
    %v571 = vpack.c.bf16 %v559, %v557
    %v572 = vpack.c.bf16 %v560, %v558
    %v573 = vpack.c.bf16 %v563, %v561
    %v574 = vpack.c.bf16 %v564, %v562
    %v575 = vpack.c.bf16 %v567, %v565
    %v576 = vpack.c.bf16 %v568, %v566
    %vm577 = vcmask 523264
    %v579 = vsel %vm577, 0, 0
    %581 = vmatprep.subr.bf16.mxu0 %v570
    %582 = vmatpush1.bf16.msra.mxu0 %v569
    %583 = vmatprep.subr.bf16.mxu0 %v572
    %584 = vmatpush1.bf16.msra.mxu0 %v571
    %585 = vmatprep.subr.bf16.mxu0 %v574
    %586 = vmatpush1.bf16.msra.mxu0 %v573
    %587 = vmatprep.subr.bf16.mxu0 %v576
    %588 = vmatpush1.bf16.msra.mxu0 %v575
    %589 = vmatprep.subr.bf16.mxu0 0
    %590 = vmatpush1.bf16.msra.mxu0 0
    %591 = vmatprep.subr.bf16.mxu0 0
    %592 = vmatpush1.bf16.msra.mxu0 0
    %593 = vmatprep.subr.bf16.mxu0 0
    %594 = vmatpush1.bf16.msra.mxu0 0
    %595 = vmatprep.subr.bf16.mxu0 0
    %596 = vmatpush1.bf16.msra.mxu0 0
    %597 = vmatprep.subr.bf16.mxu0 0
    %598 = vmatpush1.bf16.msra.mxu0 0
    %599 = vmatprep.subr.bf16.mxu0 0
    %600 = vmatpush1.bf16.msra.mxu0 0
    %601 = vmatprep.subr.bf16.mxu0 0
    %602 = vmatpush1.bf16.msra.mxu0 0
    %603 = vmatprep.subr.bf16.mxu0 0
    %604 = vmatpush1.bf16.msra.mxu0 0
    %605 = vmatprep.subr.bf16.mxu0 0
    %606 = vmatpush1.bf16.msra.mxu0 0
    %607 = vmatprep.subr.bf16.mxu0 0
    %608 = vmatpush1.bf16.msra.mxu0 0
    %609 = vmatprep.subr.bf16.mxu0 0
    %610 = vmatpush1.bf16.msra.mxu0 0
    %611 = vmatprep.subr.bf16.mxu0 0
    %612 = vmatpush1.bf16.msra.mxu0 0
    %613 = vmatprep.mubr.bf16.mxu0 0
    %614 = vmatmul.mubr.bf16.gmra.mrb[0].mxu0 %v579
    %v615 = vpop.f32.mrb[0].mxu0
    %v616 = vadd.f32 0.0, %v615
    %v617 = vpop.f32.mrb[0].mxu0
    %v618 = vadd.f32 0.0, %v617
    %v619 = vpop.f32.mrb[0].mxu0
    %v620 = vpop.f32.mrb[0].mxu0
    %621 = vdwg.mxu0
    %v622 = vadd.f32 %v260, %v616
    %v623 = vadd.f32 %v262, %v618
    %v624 = vxor.u32 %v622, 2147483648
    %v625 = vxor.u32 %v623, 2147483648
    %v626 = vmul.f32 %v624, 1.442695
    %v627 = vpow.pop %v626
    %v628 = vmul.f32 %v625, 1.442695
    %v629 = vpow.pop %v628
    %v630 = vadd.f32 %v627, 1.0
    %v631 = vadd.f32 %v629, 1.0
    %v632 = vrcp.pop %v630
    %v633 = vmul.f32 1.0, %v632
    %v634 = vrcp.pop %v631
    %v635 = vmul.f32 1.0, %v634
    %v636 = vmul.f32 %v635, 2.0
    %v637 = vsub.f32 %v636, 1.0
    %v638 = vmul.f32 %v633, 0.0
    %640 = vrot.lane.b32.xlu0 %v637, 64
    %v641 = vpop.permute.xlu0 %640
    %v643 = vmul.f32 %v633, %v641
    %645 = vrot.lane.b32.xlu0 %v643, 64
    %v646 = vpop.permute.xlu0 %645
    %v648 = vadd.f32 %v638, %v646
    %v649 = vtanh.pop %v648
    %651 = vrot.lane.b32.xlu0 %v649, 64
    %v652 = vpop.permute.xlu0 %651
    %v654 = vmul.f32 %v635, %v652
    %v655 = vadd.f32 %v654, 0.0
    %v656 = vpack.c.bf16 %v654, %v654
    %v658 = vsel %vm577, %v656, 0
    %660 = vmatprep.subr.bf16.mxu0 %v570
    %661 = vmatpush1.bf16.msra.mxu0 %v569
    %662 = vmatprep.subr.bf16.mxu0 %v572
    %663 = vmatpush1.bf16.msra.mxu0 %v571
    %664 = vmatprep.subr.bf16.mxu0 %v574
    %665 = vmatpush1.bf16.msra.mxu0 %v573
    %666 = vmatprep.subr.bf16.mxu0 %v576
    %667 = vmatpush1.bf16.msra.mxu0 %v575
    %668 = vmatprep.subr.bf16.mxu0 0
    %669 = vmatpush1.bf16.msra.mxu0 0
    %670 = vmatprep.subr.bf16.mxu0 0
    %671 = vmatpush1.bf16.msra.mxu0 0
    %672 = vmatprep.subr.bf16.mxu0 0
    %673 = vmatpush1.bf16.msra.mxu0 0
    %674 = vmatprep.subr.bf16.mxu0 0
    %675 = vmatpush1.bf16.msra.mxu0 0
    %676 = vmatprep.subr.bf16.mxu0 0
    %677 = vmatpush1.bf16.msra.mxu0 0
    %678 = vmatprep.subr.bf16.mxu0 0
    %679 = vmatpush1.bf16.msra.mxu0 0
    %680 = vmatprep.subr.bf16.mxu0 0
    %681 = vmatpush1.bf16.msra.mxu0 0
    %682 = vmatprep.subr.bf16.mxu0 0
    %683 = vmatpush1.bf16.msra.mxu0 0
    %684 = vmatprep.subr.bf16.mxu0 0
    %685 = vmatpush1.bf16.msra.mxu0 0
    %686 = vmatprep.subr.bf16.mxu0 0
    %687 = vmatpush1.bf16.msra.mxu0 0
    %688 = vmatprep.subr.bf16.mxu0 0
    %689 = vmatpush1.bf16.msra.mxu0 0
    %690 = vmatprep.subr.bf16.mxu0 0
    %691 = vmatpush1.bf16.msra.mxu0 0
    %692 = vmatprep.mubr.bf16.mxu0 0
    %693 = vmatmul.mubr.bf16.gmra.mrb[0].mxu0 %v658
    %v694 = vpop.f32.mrb[0].mxu0
    %v695 = vadd.f32 0.0, %v694
    %v696 = vpop.f32.mrb[0].mxu0
    %v697 = vadd.f32 0.0, %v696
    %v698 = vpop.f32.mrb[0].mxu0
    %v699 = vpop.f32.mrb[0].mxu0
    %700 = vdwg.mxu0
    %v701 = vadd.f32 %v301, %v695
    %v702 = vadd.f32 %v303, %v697
    %v703 = vxor.u32 %v701, 2147483648
    %v704 = vxor.u32 %v702, 2147483648
    %v705 = vmul.f32 %v703, 1.442695
    %v706 = vpow.pop %v705
    %v707 = vmul.f32 %v704, 1.442695
    %v708 = vpow.pop %v707
    %v709 = vadd.f32 %v706, 1.0
    %v710 = vadd.f32 %v708, 1.0
    %v711 = vrcp.pop %v709
    %v712 = vmul.f32 1.0, %v711
    %v713 = vrcp.pop %v710
    %v714 = vmul.f32 1.0, %v713
    %v715 = vmul.f32 %v714, 2.0
    %v716 = vsub.f32 %v715, 1.0
    %v717 = vmul.f32 %v712, %v648
    %719 = vrot.lane.b32.xlu0 %v716, 64
    %v720 = vpop.permute.xlu0 %719
    %v722 = vmul.f32 %v712, %v720
    %724 = vrot.lane.b32.xlu0 %v722, 64
    %v725 = vpop.permute.xlu0 %724
    %v727 = vadd.f32 %v717, %v725
    %v728 = vtanh.pop %v727
    %730 = vrot.lane.b32.xlu0 %v728, 64
    %v731 = vpop.permute.xlu0 %730
    %v733 = vmul.f32 %v714, %v731
    %v734 = vadd.f32 %v655, %v733
    %v735 = vpack.c.bf16 %v733, %v733
    %v737 = vsel %vm577, %v735, 0
    %739 = vmatprep.subr.bf16.mxu0 %v570
    %740 = vmatpush1.bf16.msra.mxu0 %v569
    %741 = vmatprep.subr.bf16.mxu0 %v572
    %742 = vmatpush1.bf16.msra.mxu0 %v571
    %743 = vmatprep.subr.bf16.mxu0 %v574
    %744 = vmatpush1.bf16.msra.mxu0 %v573
    %745 = vmatprep.subr.bf16.mxu0 %v576
    %746 = vmatpush1.bf16.msra.mxu0 %v575
    %747 = vmatprep.subr.bf16.mxu0 0
    %748 = vmatpush1.bf16.msra.mxu0 0
    %749 = vmatprep.subr.bf16.mxu0 0
    %750 = vmatpush1.bf16.msra.mxu0 0
    %751 = vmatprep.subr.bf16.mxu0 0
    %752 = vmatpush1.bf16.msra.mxu0 0
    %753 = vmatprep.subr.bf16.mxu0 0
    %754 = vmatpush1.bf16.msra.mxu0 0
    %755 = vmatprep.subr.bf16.mxu0 0
    %756 = vmatpush1.bf16.msra.mxu0 0
    %757 = vmatprep.subr.bf16.mxu0 0
    %758 = vmatpush1.bf16.msra.mxu0 0
    %759 = vmatprep.subr.bf16.mxu0 0
    %760 = vmatpush1.bf16.msra.mxu0 0
    %761 = vmatprep.subr.bf16.mxu0 0
    %762 = vmatpush1.bf16.msra.mxu0 0
    %763 = vmatprep.subr.bf16.mxu0 0
    %764 = vmatpush1.bf16.msra.mxu0 0
    %765 = vmatprep.subr.bf16.mxu0 0
    %766 = vmatpush1.bf16.msra.mxu0 0
    %767 = vmatprep.subr.bf16.mxu0 0
    %768 = vmatpush1.bf16.msra.mxu0 0
    %769 = vmatprep.subr.bf16.mxu0 0
    %770 = vmatpush1.bf16.msra.mxu0 0
    %771 = vmatprep.mubr.bf16.mxu0 0
    %772 = vmatmul.mubr.bf16.gmra.mrb[0].mxu0 %v737
    %v773 = vpop.f32.mrb[0].mxu0
    %v774 = vadd.f32 0.0, %v773
    %v775 = vpop.f32.mrb[0].mxu0
    %v776 = vadd.f32 0.0, %v775
    %v777 = vpop.f32.mrb[0].mxu0
    %v778 = vpop.f32.mrb[0].mxu0
    %779 = vdwg.mxu0
    %v780 = vadd.f32 %v342, %v774
    %v781 = vadd.f32 %v344, %v776
    %v782 = vxor.u32 %v780, 2147483648
    %v783 = vxor.u32 %v781, 2147483648
    %v784 = vmul.f32 %v782, 1.442695
    %v785 = vpow.pop %v784
    %v786 = vmul.f32 %v783, 1.442695
    %v787 = vpow.pop %v786
    %v788 = vadd.f32 %v785, 1.0
    %v789 = vadd.f32 %v787, 1.0
    %v790 = vrcp.pop %v788
    %v791 = vmul.f32 1.0, %v790
    %v792 = vrcp.pop %v789
    %v793 = vmul.f32 1.0, %v792
    %v794 = vmul.f32 %v793, 2.0
    %v795 = vsub.f32 %v794, 1.0
    %v796 = vmul.f32 %v791, %v727
    %798 = vrot.lane.b32.xlu0 %v795, 64
    %v799 = vpop.permute.xlu0 %798
    %v801 = vmul.f32 %v791, %v799
    %803 = vrot.lane.b32.xlu0 %v801, 64
    %v804 = vpop.permute.xlu0 %803
    %v806 = vadd.f32 %v796, %v804
    %v807 = vtanh.pop %v806
    %809 = vrot.lane.b32.xlu0 %v807, 64
    %v810 = vpop.permute.xlu0 %809
    %v812 = vmul.f32 %v793, %v810
    %v813 = vadd.f32 %v734, %v812
    %v814 = vpack.c.bf16 %v812, %v812
    %v816 = vsel %vm577, %v814, 0
    %818 = vmatprep.subr.bf16.mxu0 %v570
    %819 = vmatpush1.bf16.msra.mxu0 %v569
    %820 = vmatprep.subr.bf16.mxu0 %v572
    %821 = vmatpush1.bf16.msra.mxu0 %v571
    %822 = vmatprep.subr.bf16.mxu0 %v574
    %823 = vmatpush1.bf16.msra.mxu0 %v573
    %824 = vmatprep.subr.bf16.mxu0 %v576
    %825 = vmatpush1.bf16.msra.mxu0 %v575
    %826 = vmatprep.subr.bf16.mxu0 0
    %827 = vmatpush1.bf16.msra.mxu0 0
    %828 = vmatprep.subr.bf16.mxu0 0
    %829 = vmatpush1.bf16.msra.mxu0 0
    %830 = vmatprep.subr.bf16.mxu0 0
    %831 = vmatpush1.bf16.msra.mxu0 0
    %832 = vmatprep.subr.bf16.mxu0 0
    %833 = vmatpush1.bf16.msra.mxu0 0
    %834 = vmatprep.subr.bf16.mxu0 0
    %835 = vmatpush1.bf16.msra.mxu0 0
    %836 = vmatprep.subr.bf16.mxu0 0
    %837 = vmatpush1.bf16.msra.mxu0 0
    %838 = vmatprep.subr.bf16.mxu0 0
    %839 = vmatpush1.bf16.msra.mxu0 0
    %840 = vmatprep.subr.bf16.mxu0 0
    %841 = vmatpush1.bf16.msra.mxu0 0
    %842 = vmatprep.subr.bf16.mxu0 0
    %843 = vmatpush1.bf16.msra.mxu0 0
    %844 = vmatprep.subr.bf16.mxu0 0
    %845 = vmatpush1.bf16.msra.mxu0 0
    %846 = vmatprep.subr.bf16.mxu0 0
    %847 = vmatpush1.bf16.msra.mxu0 0
    %848 = vmatprep.subr.bf16.mxu0 0
    %849 = vmatpush1.bf16.msra.mxu0 0
    %850 = vmatprep.mubr.bf16.mxu0 0
    %851 = vmatmul.mubr.bf16.gmra.mrb[0].mxu0 %v816
    %v852 = vpop.f32.mrb[0].mxu0
    %v853 = vadd.f32 0.0, %v852
    %v854 = vpop.f32.mrb[0].mxu0
    %v855 = vadd.f32 0.0, %v854
    %v856 = vpop.f32.mrb[0].mxu0
    %v857 = vpop.f32.mrb[0].mxu0
    %858 = vdwg.mxu0
    %v859 = vadd.f32 %v383, %v853
    %v860 = vadd.f32 %v385, %v855
    %v861 = vxor.u32 %v859, 2147483648
    %v862 = vxor.u32 %v860, 2147483648
    %v863 = vmul.f32 %v861, 1.442695
    %v864 = vpow.pop %v863
    %v865 = vmul.f32 %v862, 1.442695
    %v866 = vpow.pop %v865
    %v867 = vadd.f32 %v864, 1.0
    %v868 = vadd.f32 %v866, 1.0
    %v869 = vrcp.pop %v867
    %v870 = vmul.f32 1.0, %v869
    %v871 = vrcp.pop %v868
    %v872 = vmul.f32 1.0, %v871
    %v873 = vmul.f32 %v872, 2.0
    %v874 = vsub.f32 %v873, 1.0
    %v875 = vmul.f32 %v870, %v806
    %877 = vrot.lane.b32.xlu0 %v874, 64
    %v878 = vpop.permute.xlu0 %877
    %v880 = vmul.f32 %v870, %v878
    %882 = vrot.lane.b32.xlu0 %v880, 64
    %v883 = vpop.permute.xlu0 %882
    %v885 = vadd.f32 %v875, %v883
    %v886 = vtanh.pop %v885
    %888 = vrot.lane.b32.xlu0 %v886, 64
    %v889 = vpop.permute.xlu0 %888
    %v891 = vmul.f32 %v872, %v889
    %v892 = vadd.f32 %v813, %v891
    %v893 = vpack.c.bf16 %v891, %v891
    %v895 = vsel %vm577, %v893, 0
    %897 = vmatprep.subr.bf16.mxu0 %v570
    %898 = vmatpush1.bf16.msra.mxu0 %v569
    %899 = vmatprep.subr.bf16.mxu0 %v572
    %900 = vmatpush1.bf16.msra.mxu0 %v571
    %901 = vmatprep.subr.bf16.mxu0 %v574
    %902 = vmatpush1.bf16.msra.mxu0 %v573
    %903 = vmatprep.subr.bf16.mxu0 %v576
    %904 = vmatpush1.bf16.msra.mxu0 %v575
    %905 = vmatprep.subr.bf16.mxu0 0
    %906 = vmatpush1.bf16.msra.mxu0 0
    %907 = vmatprep.subr.bf16.mxu0 0
    %908 = vmatpush1.bf16.msra.mxu0 0
    %909 = vmatprep.subr.bf16.mxu0 0
    %910 = vmatpush1.bf16.msra.mxu0 0
    %911 = vmatprep.subr.bf16.mxu0 0
    %912 = vmatpush1.bf16.msra.mxu0 0
    %913 = vmatprep.subr.bf16.mxu0 0
    %914 = vmatpush1.bf16.msra.mxu0 0
    %915 = vmatprep.subr.bf16.mxu0 0
    %916 = vmatpush1.bf16.msra.mxu0 0
    %917 = vmatprep.subr.bf16.mxu0 0
    %918 = vmatpush1.bf16.msra.mxu0 0
    %919 = vmatprep.subr.bf16.mxu0 0
    %920 = vmatpush1.bf16.msra.mxu0 0
    %921 = vmatprep.subr.bf16.mxu0 0
    %922 = vmatpush1.bf16.msra.mxu0 0
    %923 = vmatprep.subr.bf16.mxu0 0
    %924 = vmatpush1.bf16.msra.mxu0 0
    %925 = vmatprep.subr.bf16.mxu0 0
    %926 = vmatpush1.bf16.msra.mxu0 0
    %927 = vmatprep.subr.bf16.mxu0 0
    %928 = vmatpush1.bf16.msra.mxu0 0
    %929 = vmatprep.mubr.bf16.mxu0 0
    %930 = vmatmul.mubr.bf16.gmra.mrb[0].mxu0 %v895
    %v931 = vpop.f32.mrb[0].mxu0
    %v932 = vadd.f32 0.0, %v931
    %v933 = vpop.f32.mrb[0].mxu0
    %v934 = vadd.f32 0.0, %v933
    %v935 = vpop.f32.mrb[0].mxu0
    %v936 = vpop.f32.mrb[0].mxu0
    %937 = vdwg.mxu0
    %v938 = vadd.f32 %v424, %v932
    %v939 = vadd.f32 %v426, %v934
    %v940 = vxor.u32 %v938, 2147483648
    %v941 = vxor.u32 %v939, 2147483648
    %v942 = vmul.f32 %v940, 1.442695
    %v943 = vpow.pop %v942
    %v944 = vmul.f32 %v941, 1.442695
    %v945 = vpow.pop %v944
    %v946 = vadd.f32 %v943, 1.0
    %v947 = vadd.f32 %v945, 1.0
    %v948 = vrcp.pop %v946
    %v949 = vmul.f32 1.0, %v948
    %v950 = vrcp.pop %v947
    %v951 = vmul.f32 1.0, %v950
    %v952 = vmul.f32 %v951, 2.0
    %v953 = vsub.f32 %v952, 1.0
    %v954 = vmul.f32 %v949, %v885
    %956 = vrot.lane.b32.xlu0 %v953, 64
    %v957 = vpop.permute.xlu0 %956
    %v959 = vmul.f32 %v949, %v957
    %961 = vrot.lane.b32.xlu0 %v959, 64
    %v962 = vpop.permute.xlu0 %961
    %v964 = vadd.f32 %v954, %v962
    %v965 = vtanh.pop %v964
    %967 = vrot.lane.b32.xlu0 %v965, 64
    %v968 = vpop.permute.xlu0 %967
    %v970 = vmul.f32 %v951, %v968
    %v971 = vadd.f32 %v892, %v970
    %v972 = vpack.c.bf16 %v970, %v970
    %v974 = vsel %vm577, %v972, 0
    %976 = vmatprep.subr.bf16.mxu0 %v570
    %977 = vmatpush1.bf16.msra.mxu0 %v569
    %978 = vmatprep.subr.bf16.mxu0 %v572
    %979 = vmatpush1.bf16.msra.mxu0 %v571
    %980 = vmatprep.subr.bf16.mxu0 %v574
    %981 = vmatpush1.bf16.msra.mxu0 %v573
    %982 = vmatprep.subr.bf16.mxu0 %v576
    %983 = vmatpush1.bf16.msra.mxu0 %v575
    %984 = vmatprep.subr.bf16.mxu0 0
    %985 = vmatpush1.bf16.msra.mxu0 0
    %986 = vmatprep.subr.bf16.mxu0 0
    %987 = vmatpush1.bf16.msra.mxu0 0
    %988 = vmatprep.subr.bf16.mxu0 0
    %989 = vmatpush1.bf16.msra.mxu0 0
    %990 = vmatprep.subr.bf16.mxu0 0
    %991 = vmatpush1.bf16.msra.mxu0 0
    %992 = vmatprep.subr.bf16.mxu0 0
    %993 = vmatpush1.bf16.msra.mxu0 0
    %994 = vmatprep.subr.bf16.mxu0 0
    %995 = vmatpush1.bf16.msra.mxu0 0
    %996 = vmatprep.subr.bf16.mxu0 0
    %997 = vmatpush1.bf16.msra.mxu0 0
    %998 = vmatprep.subr.bf16.mxu0 0
    %999 = vmatpush1.bf16.msra.mxu0 0
    %1000 = vmatprep.subr.bf16.mxu0 0
    %1001 = vmatpush1.bf16.msra.mxu0 0
    %1002 = vmatprep.subr.bf16.mxu0 0
    %1003 = vmatpush1.bf16.msra.mxu0 0
    %1004 = vmatprep.subr.bf16.mxu0 0
    %1005 = vmatpush1.bf16.msra.mxu0 0
    %1006 = vmatprep.subr.bf16.mxu0 0
    %1007 = vmatpush1.bf16.msra.mxu0 0
    %1008 = vmatprep.mubr.bf16.mxu0 0
    %1009 = vmatmul.mubr.bf16.gmra.mrb[0].mxu0 %v974
    %v1010 = vpop.f32.mrb[0].mxu0
    %v1011 = vadd.f32 0.0, %v1010
    %v1012 = vpop.f32.mrb[0].mxu0
    %v1013 = vadd.f32 0.0, %v1012
    %v1014 = vpop.f32.mrb[0].mxu0
    %v1015 = vpop.f32.mrb[0].mxu0
    %1016 = vdwg.mxu0
    %v1017 = vadd.f32 %v465, %v1011
    %v1018 = vadd.f32 %v467, %v1013
    %v1019 = vxor.u32 %v1017, 2147483648
    %v1020 = vxor.u32 %v1018, 2147483648
    %v1021 = vmul.f32 %v1019, 1.442695
    %v1022 = vpow.pop %v1021
    %v1023 = vmul.f32 %v1020, 1.442695
    %v1024 = vpow.pop %v1023
    %v1025 = vadd.f32 %v1022, 1.0
    %v1026 = vadd.f32 %v1024, 1.0
    %v1027 = vrcp.pop %v1025
    %v1028 = vmul.f32 1.0, %v1027
    %v1029 = vrcp.pop %v1026
    %v1030 = vmul.f32 1.0, %v1029
    %v1031 = vmul.f32 %v1030, 2.0
    %v1032 = vsub.f32 %v1031, 1.0
    %v1033 = vmul.f32 %v1028, %v964
    %1035 = vrot.lane.b32.xlu0 %v1032, 64
    %v1036 = vpop.permute.xlu0 %1035
    %v1038 = vmul.f32 %v1028, %v1036
    %1040 = vrot.lane.b32.xlu0 %v1038, 64
    %v1041 = vpop.permute.xlu0 %1040
    %v1043 = vadd.f32 %v1033, %v1041
    %v1044 = vtanh.pop %v1043
    %1046 = vrot.lane.b32.xlu0 %v1044, 64
    %v1047 = vpop.permute.xlu0 %1046
    %v1049 = vmul.f32 %v1030, %v1047
    %v1050 = vadd.f32 %v971, %v1049
    %v1051 = vpack.c.bf16 %v1049, %v1049
    %v1053 = vsel %vm577, %v1051, 0
    %1055 = vmatprep.subr.bf16.mxu0 %v570
    %1056 = vmatpush1.bf16.msra.mxu0 %v569
    %1057 = vmatprep.subr.bf16.mxu0 %v572
    %1058 = vmatpush1.bf16.msra.mxu0 %v571
    %1059 = vmatprep.subr.bf16.mxu0 %v574
    %1060 = vmatpush1.bf16.msra.mxu0 %v573
    %1061 = vmatprep.subr.bf16.mxu0 %v576
    %1062 = vmatpush1.bf16.msra.mxu0 %v575
    %1063 = vmatprep.subr.bf16.mxu0 0
    %1064 = vmatpush1.bf16.msra.mxu0 0
    %1065 = vmatprep.subr.bf16.mxu0 0
    %1066 = vmatpush1.bf16.msra.mxu0 0
    %1067 = vmatprep.subr.bf16.mxu0 0
    %1068 = vmatpush1.bf16.msra.mxu0 0
    %1069 = vmatprep.subr.bf16.mxu0 0
    %1070 = vmatpush1.bf16.msra.mxu0 0
    %1071 = vmatprep.subr.bf16.mxu0 0
    %1072 = vmatpush1.bf16.msra.mxu0 0
    %1073 = vmatprep.subr.bf16.mxu0 0
    %1074 = vmatpush1.bf16.msra.mxu0 0
    %1075 = vmatprep.subr.bf16.mxu0 0
    %1076 = vmatpush1.bf16.msra.mxu0 0
    %1077 = vmatprep.subr.bf16.mxu0 0
    %1078 = vmatpush1.bf16.msra.mxu0 0
    %1079 = vmatprep.subr.bf16.mxu0 0
    %1080 = vmatpush1.bf16.msra.mxu0 0
    %1081 = vmatprep.subr.bf16.mxu0 0
    %1082 = vmatpush1.bf16.msra.mxu0 0
    %1083 = vmatprep.subr.bf16.mxu0 0
    %1084 = vmatpush1.bf16.msra.mxu0 0
    %1085 = vmatprep.subr.bf16.mxu0 0
    %1086 = vmatpush1.bf16.msra.mxu0 0
    %1087 = vmatprep.mubr.bf16.mxu0 0
    %1088 = vmatmul.mubr.bf16.gmra.mrb[0].mxu0 %v1053
    %v1089 = vpop.f32.mrb[0].mxu0
    %v1090 = vadd.f32 0.0, %v1089
    %v1091 = vpop.f32.mrb[0].mxu0
    %v1092 = vadd.f32 0.0, %v1091
    %v1093 = vpop.f32.mrb[0].mxu0
    %v1094 = vpop.f32.mrb[0].mxu0
    %1095 = vdwg.mxu0
    %v1096 = vadd.f32 %v506, %v1090
    %v1097 = vadd.f32 %v508, %v1092
    %v1098 = vxor.u32 %v1096, 2147483648
    %v1099 = vxor.u32 %v1097, 2147483648
    %v1100 = vmul.f32 %v1098, 1.442695
    %v1101 = vpow.pop %v1100
    %v1102 = vmul.f32 %v1099, 1.442695
    %v1103 = vpow.pop %v1102
    %v1104 = vadd.f32 %v1101, 1.0
    %v1105 = vadd.f32 %v1103, 1.0
    %v1106 = vrcp.pop %v1104
    %v1107 = vmul.f32 1.0, %v1106
    %v1108 = vrcp.pop %v1105
    %v1109 = vmul.f32 1.0, %v1108
    %v1110 = vmul.f32 %v1109, 2.0
    %v1111 = vsub.f32 %v1110, 1.0
    %v1112 = vmul.f32 %v1107, %v1043
    %1114 = vrot.lane.b32.xlu0 %v1111, 64
    %v1115 = vpop.permute.xlu0 %1114
    %v1117 = vmul.f32 %v1107, %v1115
    %1119 = vrot.lane.b32.xlu0 %v1117, 64
    %v1120 = vpop.permute.xlu0 %1119
    %v1122 = vadd.f32 %v1112, %v1120
    %v1123 = vtanh.pop %v1122
    %1125 = vrot.lane.b32.xlu0 %v1123, 64
    %v1126 = vpop.permute.xlu0 %1125
    %v1128 = vmul.f32 %v1109, %v1126
    %v1129 = vadd.f32 %v1050, %v1128
    %v1130 = vpack.c.bf16 %v1128, %v1128
    %v1132 = vsel %vm577, %v1130, 0
    %1134 = vmatprep.subr.bf16.mxu0 %v570
    %1135 = vmatpush1.bf16.msra.mxu0 %v569
    %1136 = vmatprep.subr.bf16.mxu0 %v572
    %1137 = vmatpush1.bf16.msra.mxu0 %v571
    %1138 = vmatprep.subr.bf16.mxu0 %v574
    %1139 = vmatpush1.bf16.msra.mxu0 %v573
    %1140 = vmatprep.subr.bf16.mxu0 %v576
    %1141 = vmatpush1.bf16.msra.mxu0 %v575
    %1142 = vmatprep.subr.bf16.mxu0 0
    %1143 = vmatpush1.bf16.msra.mxu0 0
    %1144 = vmatprep.subr.bf16.mxu0 0
    %1145 = vmatpush1.bf16.msra.mxu0 0
    %1146 = vmatprep.subr.bf16.mxu0 0
    %1147 = vmatpush1.bf16.msra.mxu0 0
    %1148 = vmatprep.subr.bf16.mxu0 0
    %1149 = vmatpush1.bf16.msra.mxu0 0
    %1150 = vmatprep.subr.bf16.mxu0 0
    %1151 = vmatpush1.bf16.msra.mxu0 0
    %1152 = vmatprep.subr.bf16.mxu0 0
    %1153 = vmatpush1.bf16.msra.mxu0 0
    %1154 = vmatprep.subr.bf16.mxu0 0
    %1155 = vmatpush1.bf16.msra.mxu0 0
    %1156 = vmatprep.subr.bf16.mxu0 0
    %1157 = vmatpush1.bf16.msra.mxu0 0
    %1158 = vmatprep.subr.bf16.mxu0 0
    %1159 = vmatpush1.bf16.msra.mxu0 0
    %1160 = vmatprep.subr.bf16.mxu0 0
    %1161 = vmatpush1.bf16.msra.mxu0 0
    %1162 = vmatprep.subr.bf16.mxu0 0
    %1163 = vmatpush1.bf16.msra.mxu0 0
    %1164 = vmatprep.subr.bf16.mxu0 0
    %1165 = vmatpush1.bf16.msra.mxu0 0
    %1166 = vmatprep.mubr.bf16.mxu0 0
    %1167 = vmatmul.mubr.bf16.gmra.mrb[0].mxu0 %v1132
    %v1168 = vpop.f32.mrb[0].mxu0
    %v1169 = vadd.f32 0.0, %v1168
    %v1170 = vpop.f32.mrb[0].mxu0
    %v1171 = vadd.f32 0.0, %v1170
    %v1172 = vpop.f32.mrb[0].mxu0
    %v1173 = vpop.f32.mrb[0].mxu0
    %1174 = vdwg.mxu0
    %v1175 = vadd.f32 %v547, %v1169
    %v1176 = vadd.f32 %v549, %v1171
    %v1177 = vxor.u32 %v1175, 2147483648
    %v1178 = vxor.u32 %v1176, 2147483648
    %v1179 = vmul.f32 %v1177, 1.442695
    %v1180 = vpow.pop %v1179
    %v1181 = vmul.f32 %v1178, 1.442695
    %v1182 = vpow.pop %v1181
    %v1183 = vadd.f32 %v1180, 1.0
    %v1184 = vadd.f32 %v1182, 1.0
    %v1185 = vrcp.pop %v1183
    %v1186 = vmul.f32 1.0, %v1185
    %v1187 = vrcp.pop %v1184
    %v1188 = vmul.f32 1.0, %v1187
    %v1189 = vmul.f32 %v1188, 2.0
    %v1190 = vsub.f32 %v1189, 1.0
    %v1191 = vmul.f32 %v1186, %v1122
    %1193 = vrot.lane.b32.xlu0 %v1190, 64
    %v1194 = vpop.permute.xlu0 %1193
    %v1196 = vmul.f32 %v1186, %v1194
    %1198 = vrot.lane.b32.xlu0 %v1196, 64
    %v1199 = vpop.permute.xlu0 %1198
    %v1201 = vadd.f32 %v1191, %v1199
    %v1202 = vtanh.pop %v1201
    %1204 = vrot.lane.b32.xlu0 %v1202, 64
    %v1205 = vpop.permute.xlu0 %1204
    %v1207 = vmul.f32 %v1188, %v1205
    %v1208 = vadd.f32 %v1129, %v1207
    %v1209 = vmul.f32 %v1208, 0.125
    %v1210 = vld [vmem:[%s3] sm:$0xff]
    %v1211 = vld [vmem:[%s3 + $0x8] sm:$0xff]
    %v1212 = vld [vmem:[%s3 + $0x10] sm:$0xff]
    %v1213 = vld [vmem:[%s3 + $0x18] sm:$0xff]
    %v1214 = vld [vmem:[%s3 + $0x20] sm:$0xff]
    %v1215 = vld [vmem:[%s3 + $0x28] sm:$0xff]
    %v1216 = vld [vmem:[%s3 + $0x30] sm:$0xff]
    %v1217 = vld [vmem:[%s3 + $0x38] sm:$0xff]
    %v1218 = vld [vmem:[%s3 + $0x40] sm:$0xff]
    %v1219 = vld [vmem:[%s3 + $0x48] sm:$0xff]
    %v1220 = vld [vmem:[%s3 + $0x50] sm:$0xff]
    %v1221 = vld [vmem:[%s3 + $0x58] sm:$0xff]
    %v1222 = vld [vmem:[%s3 + $0x60] sm:$0xff]
    %v1223 = vld [vmem:[%s3 + $0x68] sm:$0xff]
    %v1224 = vld [vmem:[%s3 + $0x70] sm:$0xff]
    %v1225 = vld [vmem:[%s3 + $0x78] sm:$0xff]
    %v1226 = vld [vmem:[%s3 + $0x80] sm:$0xff]
    %v1227 = vld [vmem:[%s3 + $0x88] sm:$0xff]
    %v1228 = vld [vmem:[%s3 + $0x90] sm:$0xff]
    %v1229 = vld [vmem:[%s3 + $0x98] sm:$0xff]
    %v1230 = vld [vmem:[%s3 + $0xa0] sm:$0xff]
    %v1231 = vld [vmem:[%s3 + $0xa8] sm:$0xff]
    %v1232 = vld [vmem:[%s3 + $0xb0] sm:$0xff]
    %v1233 = vld [vmem:[%s3 + $0xb8] sm:$0xff]
    %v1234 = vld [vmem:[%s3 + $0xc0] sm:$0x7]
    %v1235 = vlaneseq
    %v1236 = vshrl.u32 %v1235, 7
    %v1237 = vsub.s32 0, %v1236
    %v1238 = vrot.slane %v1234, %v1237
    %v1240 = vsel %vm577, %v1209, 0
    %1242 = vmatprep.subr.mxu0 0.0
    %1243 = vmatpush1.msra.mxu0 %v1210
    %1244 = vmatprep.subr.mxu0 0.0
    %1245 = vmatpush1.msra.mxu0 %v1211
    %1246 = vmatprep.subr.mxu0 0.0
    %1247 = vmatpush1.msra.mxu0 %v1212
    %1248 = vmatprep.subr.mxu0 0.0
    %1249 = vmatpush1.msra.mxu0 %v1213
    %1250 = vmatprep.subr.mxu0 0.0
    %1251 = vmatpush1.msra.mxu0 %v1214
    %1252 = vmatprep.subr.mxu0 0.0
    %1253 = vmatpush1.msra.mxu0 %v1215
    %1254 = vmatprep.subr.mxu0 0.0
    %1255 = vmatpush1.msra.mxu0 %v1216
    %1256 = vmatprep.subr.mxu0 0.0
    %1257 = vmatpush1.msra.mxu0 %v1217
    %1258 = vmatprep.subr.mxu0 0.0
    %1259 = vmatpush1.msra.mxu0 0.0
    %1260 = vmatprep.subr.mxu0 0.0
    %1261 = vmatpush1.msra.mxu0 0.0
    %1262 = vmatprep.subr.mxu0 0.0
    %1263 = vmatpush1.msra.mxu0 0.0
    %1264 = vmatprep.subr.mxu0 0.0
    %1265 = vmatpush1.msra.mxu0 0.0
    %1266 = vmatprep.subr.mxu0 0.0
    %1267 = vmatpush1.msra.mxu0 0.0
    %1268 = vmatprep.subr.mxu0 0.0
    %1269 = vmatpush1.msra.mxu0 0.0
    %1270 = vmatprep.subr.mxu0 0.0
    %1271 = vmatpush1.msra.mxu0 0.0
    %1272 = vmatprep.subr.mxu0 0.0
    %1273 = vmatpush1.msra.mxu0 0.0
    %1274 = vmatprep.subr.mxu0 0.0
    %1275 = vmatpush1.msra.mxu0 0.0
    %1276 = vmatprep.subr.mxu0 0.0
    %1277 = vmatpush1.msra.mxu0 0.0
    %1278 = vmatprep.subr.mxu0 0.0
    %1279 = vmatpush1.msra.mxu0 0.0
    %1280 = vmatprep.subr.mxu0 0.0
    %1281 = vmatpush1.msra.mxu0 0.0
    %1282 = vmatprep.subr.mxu0 0.0
    %1283 = vmatpush1.msra.mxu0 0.0
    %1284 = vmatprep.subr.mxu0 0.0
    %1285 = vmatpush1.msra.mxu0 0.0
    %1286 = vmatprep.subr.mxu0 0.0
    %1287 = vmatpush1.msra.mxu0 0.0
    %1288 = vmatprep.subr.mxu0 0.0
    %1289 = vmatpush1.msra.mxu0 0.0
    %1290 = vmatprep.subr.mxu0 0.0
    %1291 = vmatpush1.msra.mxu0 0.0
    %1292 = vmatprep.subr.mxu0 0.0
    %1293 = vmatpush1.msra.mxu0 0.0
    %1294 = vmatprep.subr.mxu0 0.0
    %1295 = vmatpush1.msra.mxu0 0.0
    %1296 = vmatprep.subr.mxu0 0.0
    %1297 = vmatpush1.msra.mxu0 0.0
    %1298 = vmatprep.subr.mxu0 0.0
    %1299 = vmatpush1.msra.mxu0 0.0
    %1300 = vmatprep.subr.mxu0 0.0
    %1301 = vmatpush1.msra.mxu0 0.0
    %1302 = vmatprep.subr.mxu0 0.0
    %1303 = vmatpush1.msra.mxu0 0.0
    %1304 = vmatprep.subr.mxu0 0.0
    %1305 = vmatpush1.msra.mxu0 0.0
    %1306 = vmatprep.mubr.f32.mxu0 0.0
    %1307 = vmatmul.mubr.f32.gmra.mrb[0].mxu0 %v1240
    %v1308 = vpop.f32.mrb[0].mxu0
    %v1309 = vadd.f32 %v1238, %v1308
    %v1310 = vpop.f32.mrb[0].mxu0
    %1311 = vdwg.mxu0
    %v1312 = vmul.f32 %v1207, %v1309
    %v1313 = vlaneseq
    %v1314 = vshrl.u32 %v1313, 7
    %v1315 = vsub.s32 1, %v1314
    %v1316 = vrot.slane %v1234, %v1315
    %v1318 = vsel %vm577, %v1312, 0
    %1320 = vmatprep.subr.mxu0 0.0
    %1321 = vmatpush1.msra.mxu0 %v1218
    %1322 = vmatprep.subr.mxu0 0.0
    %1323 = vmatpush1.msra.mxu0 %v1219
    %1324 = vmatprep.subr.mxu0 0.0
    %1325 = vmatpush1.msra.mxu0 %v1220
    %1326 = vmatprep.subr.mxu0 0.0
    %1327 = vmatpush1.msra.mxu0 %v1221
    %1328 = vmatprep.subr.mxu0 0.0
    %1329 = vmatpush1.msra.mxu0 %v1222
    %1330 = vmatprep.subr.mxu0 0.0
    %1331 = vmatpush1.msra.mxu0 %v1223
    %1332 = vmatprep.subr.mxu0 0.0
    %1333 = vmatpush1.msra.mxu0 %v1224
    %1334 = vmatprep.subr.mxu0 0.0
    %1335 = vmatpush1.msra.mxu0 %v1225
    %1336 = vmatprep.subr.mxu0 0.0
    %1337 = vmatpush1.msra.mxu0 0.0
    %1338 = vmatprep.subr.mxu0 0.0
    %1339 = vmatpush1.msra.mxu0 0.0
    %1340 = vmatprep.subr.mxu0 0.0
    %1341 = vmatpush1.msra.mxu0 0.0
    %1342 = vmatprep.subr.mxu0 0.0
    %1343 = vmatpush1.msra.mxu0 0.0
    %1344 = vmatprep.subr.mxu0 0.0
    %1345 = vmatpush1.msra.mxu0 0.0
    %1346 = vmatprep.subr.mxu0 0.0
    %1347 = vmatpush1.msra.mxu0 0.0
    %1348 = vmatprep.subr.mxu0 0.0
    %1349 = vmatpush1.msra.mxu0 0.0
    %1350 = vmatprep.subr.mxu0 0.0
    %1351 = vmatpush1.msra.mxu0 0.0
    %1352 = vmatprep.subr.mxu0 0.0
    %1353 = vmatpush1.msra.mxu0 0.0
    %1354 = vmatprep.subr.mxu0 0.0
    %1355 = vmatpush1.msra.mxu0 0.0
    %1356 = vmatprep.subr.mxu0 0.0
    %1357 = vmatpush1.msra.mxu0 0.0
    %1358 = vmatprep.subr.mxu0 0.0
    %1359 = vmatpush1.msra.mxu0 0.0
    %1360 = vmatprep.subr.mxu0 0.0
    %1361 = vmatpush1.msra.mxu0 0.0
    %1362 = vmatprep.subr.mxu0 0.0
    %1363 = vmatpush1.msra.mxu0 0.0
    %1364 = vmatprep.subr.mxu0 0.0
    %1365 = vmatpush1.msra.mxu0 0.0
    %1366 = vmatprep.subr.mxu0 0.0
    %1367 = vmatpush1.msra.mxu0 0.0
    %1368 = vmatprep.subr.mxu0 0.0
    %1369 = vmatpush1.msra.mxu0 0.0
    %1370 = vmatprep.subr.mxu0 0.0
    %1371 = vmatpush1.msra.mxu0 0.0
    %1372 = vmatprep.subr.mxu0 0.0
    %1373 = vmatpush1.msra.mxu0 0.0
    %1374 = vmatprep.subr.mxu0 0.0
    %1375 = vmatpush1.msra.mxu0 0.0
    %1376 = vmatprep.subr.mxu0 0.0
    %1377 = vmatpush1.msra.mxu0 0.0
    %1378 = vmatprep.subr.mxu0 0.0
    %1379 = vmatpush1.msra.mxu0 0.0
    %1380 = vmatprep.subr.mxu0 0.0
    %1381 = vmatpush1.msra.mxu0 0.0
    %1382 = vmatprep.subr.mxu0 0.0
    %1383 = vmatpush1.msra.mxu0 0.0
    %1384 = vmatprep.mubr.f32.mxu0 0.0
    %1385 = vmatmul.mubr.f32.gmra.mrb[0].mxu0 %v1318
    %v1386 = vpop.f32.mrb[0].mxu0
    %v1387 = vadd.f32 %v1316, %v1386
    %v1388 = vpop.f32.mrb[0].mxu0
    %1389 = vdwg.mxu0
    %v1390 = vmax.f32 %v1387, 0.0
    %v1391 = vlaneseq
    %v1392 = vshrl.u32 %v1391, 7
    %v1393 = vsub.s32 2, %v1392
    %v1394 = vrot.slane %v1234, %v1393
    %v1396 = vsel %vm577, %v1390, 0
    %1398 = vmatprep.subr.mxu0 0.0
    %1399 = vmatpush1.msra.mxu0 %v1226
    %1400 = vmatprep.subr.mxu0 0.0
    %1401 = vmatpush1.msra.mxu0 %v1227
    %1402 = vmatprep.subr.mxu0 0.0
    %1403 = vmatpush1.msra.mxu0 %v1228
    %1404 = vmatprep.subr.mxu0 0.0
    %1405 = vmatpush1.msra.mxu0 %v1229
    %1406 = vmatprep.subr.mxu0 0.0
    %1407 = vmatpush1.msra.mxu0 %v1230
    %1408 = vmatprep.subr.mxu0 0.0
    %1409 = vmatpush1.msra.mxu0 %v1231
    %1410 = vmatprep.subr.mxu0 0.0
    %1411 = vmatpush1.msra.mxu0 %v1232
    %1412 = vmatprep.subr.mxu0 0.0
    %1413 = vmatpush1.msra.mxu0 %v1233
    %1414 = vmatprep.subr.mxu0 0.0
    %1415 = vmatpush1.msra.mxu0 0.0
    %1416 = vmatprep.subr.mxu0 0.0
    %1417 = vmatpush1.msra.mxu0 0.0
    %1418 = vmatprep.subr.mxu0 0.0
    %1419 = vmatpush1.msra.mxu0 0.0
    %1420 = vmatprep.subr.mxu0 0.0
    %1421 = vmatpush1.msra.mxu0 0.0
    %1422 = vmatprep.subr.mxu0 0.0
    %1423 = vmatpush1.msra.mxu0 0.0
    %1424 = vmatprep.subr.mxu0 0.0
    %1425 = vmatpush1.msra.mxu0 0.0
    %1426 = vmatprep.subr.mxu0 0.0
    %1427 = vmatpush1.msra.mxu0 0.0
    %1428 = vmatprep.subr.mxu0 0.0
    %1429 = vmatpush1.msra.mxu0 0.0
    %1430 = vmatprep.subr.mxu0 0.0
    %1431 = vmatpush1.msra.mxu0 0.0
    %1432 = vmatprep.subr.mxu0 0.0
    %1433 = vmatpush1.msra.mxu0 0.0
    %1434 = vmatprep.subr.mxu0 0.0
    %1435 = vmatpush1.msra.mxu0 0.0
    %1436 = vmatprep.subr.mxu0 0.0
    %1437 = vmatpush1.msra.mxu0 0.0
    %1438 = vmatprep.subr.mxu0 0.0
    %1439 = vmatpush1.msra.mxu0 0.0
    %1440 = vmatprep.subr.mxu0 0.0
    %1441 = vmatpush1.msra.mxu0 0.0
    %1442 = vmatprep.subr.mxu0 0.0
    %1443 = vmatpush1.msra.mxu0 0.0
    %1444 = vmatprep.subr.mxu0 0.0
    %1445 = vmatpush1.msra.mxu0 0.0
    %1446 = vmatprep.subr.mxu0 0.0
    %1447 = vmatpush1.msra.mxu0 0.0
    %1448 = vmatprep.subr.mxu0 0.0
    %1449 = vmatpush1.msra.mxu0 0.0
    %1450 = vmatprep.subr.mxu0 0.0
    %1451 = vmatpush1.msra.mxu0 0.0
    %1452 = vmatprep.subr.mxu0 0.0
    %1453 = vmatpush1.msra.mxu0 0.0
    %1454 = vmatprep.subr.mxu0 0.0
    %1455 = vmatpush1.msra.mxu0 0.0
    %1456 = vmatprep.subr.mxu0 0.0
    %1457 = vmatpush1.msra.mxu0 0.0
    %1458 = vmatprep.subr.mxu0 0.0
    %1459 = vmatpush1.msra.mxu0 0.0
    %1460 = vmatprep.subr.mxu0 0.0
    %1461 = vmatpush1.msra.mxu0 0.0
    %1462 = vmatprep.mubr.f32.mxu0 0.0
    %1463 = vmatmul.mubr.f32.gmra.mrb[0].mxu0 %v1396
    %v1464 = vpop.f32.mrb[0].mxu0
    %v1465 = vadd.f32 %v1394, %v1464
    %v1466 = vpop.f32.mrb[0].mxu0
    %1467 = vdwg.mxu0
    %vm1468 = vcmask 33792
    %1469 = vst.msk [vmem:[#allocation5] sm:$0x3] %vm1468, %v1465
    // Predicated region
    $region22: #{run_model.1} parent=1 // pred_check
      _
    $region23: #{run_model.1} parent=1 // pred_check_branch
      %1471 = sbr.rel (0) target = $region25
    $region24: #{run_model.1} parent=1 // pred_region
      %s1473 = ssub.s32 32, 32
      %1474 = vsyncadd [#allocation4], %s1473
      %s1476 = sshll.u32 [#allocation5], 4
      %s1477 = int_to_ptr.vmem [resolvable:$true] %s1476
      %1479 = dma.vmem_to_hbm [thread:$0]  %s1477, 32, %s4, [#allocation4]
    $region25: #{run_model.1} parent=1 // pred_fallthru
      _
    // Predicated region
    $region26: #{run_model.1} parent=1 // pred_check
      _
    $region27: #{run_model.1} parent=1 // pred_check_branch
      %1481 = sbr.rel (0) target = $region29
    $region28: #{run_model.1} parent=1 // pred_region
      %1482 = dma.done [#allocation4], 32
    $region29: #{run_model.1} parent=1 // pred_fallthru
      _
    %1483 = vsyncpa [#allocation3], 1
    %1484 = vsyncpa [#allocation4], 1

</llo_original>
